<compile_context>
chip_gen: v5e
topology: v5e:2x2
jax: 0.10.0
libtpu: 0.0.40
codegen_flags: <defaults>
</compile_context>

<pallas_src>
import jax
import jax.numpy as jnp
import numpy as np
from jax import lax
from jax.experimental import pallas as pl
from jax.experimental.pallas import tpu as pltpu

F32 = jnp.float32
_BN_EPS = 1e-5
_REF_PREC = lax.Precision.HIGHEST     # used only for trace-time weight folding / reference


def _round_up(x, m):
    return ((x + m - 1) // m) * m


# ---------------------------------------------------------------------------
# trace-time planning helpers
# ---------------------------------------------------------------------------
def _chain_plan(kernels, pads, base, wp, l_out):
    """Flat tap-offset plan for a chain of stride-1 convs on a row-stride-`wp`
    flattened grid.  `base` = flat position of the final output's index 0 inside
    the shared (anchor-0) input buffer; `l_out` = final flat extent.

    Returns (offsets, lengths, anchors):
      offsets[s] : flat tap offsets of stage s (dh-major, dw-minor)
      lengths[0] : required input length; lengths[s]: stage-s output length
      anchors[s] : flat anchor of the stage-s output coordinate system
    """
    n = len(kernels)
    anchor = [0] * (n + 1)
    anchor[n] = base
    for s in range(n, 1, -1):
        ph, pw = pads[s - 1]
        anchor[s - 1] = anchor[s] - (ph * wp + pw)
    anchor[0] = 0
    lengths = [0] * (n + 1)
    lengths[n] = l_out
    offsets = [None] * n
    for s in range(n, 0, -1):
        kh, kw = kernels[s - 1]
        ph, pw = pads[s - 1]
        offs = []
        for dh in range(kh):
            for dw in range(kw):
                off = (anchor[s] - anchor[s - 1]) + (dh - ph) * wp + (dw - pw)
                assert off >= 0, "chain halo exceeds pre-padding"
                offs.append(off)
        offsets[s - 1] = tuple(offs)
        lengths[s - 1] = lengths[s] + max(offs)
    return offsets, lengths, anchor


def _stack_w(w):
    """(C_out, C_in, kh, kw) -> (C_out, kh*kw*C_in), tap-major (dh, dw)."""
    co, ci, kh, kw = w.shape
    return jnp.transpose(w.astype(F32), (0, 2, 3, 1)).reshape(co, kh * kw * ci)


def _bn_affine(gamma, beta, mean, var, conv_bias=None):
    """Fold eval-mode BatchNorm (+ optional preceding conv bias) into scale/shift."""
    scale = gamma.astype(F32) / jnp.sqrt(var.astype(F32) + _BN_EPS)
    shift = beta.astype(F32) - mean.astype(F32) * scale
    if conv_bias is not None:
        shift = shift + scale * conv_bias.astype(F32)
    return scale.reshape(-1, 1), shift.reshape(-1, 1)


def _compose_up_conv0(up_w, conv0_w):
    """Compose ConvTranspose2d(k=2,s=2) with Conv2d(k=3,s=2,p=1) into a single
    equivalent 2x2 stride-1 conv on the original grid (taps at (i-1+p, j-1+q)).
    The transposed conv's bias is handled separately via a shift map."""
    c_in = up_w.shape[0]
    c_out = conv0_w.shape[0]
    # conv0 row-tap u -> (composed tap p, ConvT phase a); same mapping for columns.
    pa = ((0, 1), (1, 0), (1, 1))
    k = jnp.zeros((c_out, c_in, 2, 2), F32)
    for u, (p, a) in enumerate(pa):
        for v, (q, b) in enumerate(pa):
            k = k.at[:, :, p, q].add(
                jnp.einsum("om,cm->oc", conv0_w[:, :, u, v].astype(F32),
                           up_w[:, :, a, b].astype(F32), precision=_REF_PREC))
    return k


def _valid_mask(anchor, length, wp, ph, pw, h, w):
    """(1, length) f32 mask: 1 where flat index maps to a real HxW pixel."""
    pos = np.arange(length) + anchor
    r = pos // wp - ph
    c = pos % wp - pw
    ok = (r >= 0) & (r < h) & (c >= 0) & (c < w)
    return jnp.asarray(ok.astype(np.float32))[None, :]


def _const_spec(a):
    """Whole-array block, constant index_map -> stays resident in VMEM."""
    nd = a.ndim
    return pl.BlockSpec(tuple(a.shape), lambda n, _nd=nd: (0,) * _nd)


# ---------------------------------------------------------------------------
# the single fused kernel
# ---------------------------------------------------------------------------
def _make_up_kernel(offs_x, l_xr, base, l_out,
                    offs1, offs2a, offs2b, len_h2,
                    offs3a, offs3b, len_h3, offs4dw):
    def _stack(src, offs, l):
        if len(offs) == 1:
            o = offs[0]
            return src[:, o:o + l]
        return jnp.concatenate([src[:, o:o + l] for o in offs], axis=0)

    def _mm(w_ref, rhs):
        # single wide-K MXU matmul, f32 accumulation, default precision
        return lax.dot_general(w_ref[...], rhs, (((1,), (0,)), ((), ())),
                               preferred_element_type=F32)

    def kernel(x_ref, kc_ref, s0_ref, mxr_ref,
               w1_ref, t1_ref,
               w2a_ref, w2b_ref, mh2_ref, t2_ref,
               w3a_ref, w3b_ref, t3_ref,
               wdw_ref, bdw_ref, wpw_ref, t4_ref,
               out_ref):
        x = x_ref[0].astype(F32)                       # (C_in, L_x)

        # ---- fused (ConvTranspose o conv0) + BN0 + ReLU -> xr, VMEM resident ----
        xr = jnp.maximum(_mm(kc_ref, _stack(x, offs_x, l_xr)) + s0_ref[...], 0.0)
        xr = xr * mxr_ref[...]                         # zero-pad ring of xr

        total = xr[:, base:base + l_out]               # residual term

        # ---- myConv1: 1x1 (+bias) -> BN -> ReLU ----
        o1 = offs1[0]
        total = total + jnp.maximum(
            _mm(w1_ref, xr[:, o1:o1 + l_out]) + t1_ref[...], 0.0)

        # ---- myConv2: 3x3 -> 3x3 -> BN -> ReLU (intermediate re-zero-padded) ----
        h2 = _mm(w2a_ref, _stack(xr, offs2a, len_h2)) * mh2_ref[...]
        b2 = _mm(w2b_ref, _stack(h2, offs2b, l_out))
        total = total + jnp.maximum(b2 + t2_ref[...], 0.0)

        # ---- myConv3: (1,7) -> (7,1) -> BN -> ReLU ----
        h3 = _mm(w3a_ref, _stack(xr, offs3a, len_h3))
        b3 = _mm(w3b_ref, _stack(h3, offs3b, l_out))
        total = total + jnp.maximum(b3 + t3_ref[...], 0.0)

        # ---- myConv4: depthwise 3x3 (+bias, on the VPU) -> 1x1 -> BN -> ReLU ----
        acc = None
        for k, off in enumerate(offs4dw):
            contrib = wdw_ref[k] * xr[:, off:off + l_out]   # (C,1)*(C,L)
            acc = contrib if acc is None else acc + contrib
        acc = acc + bdw_ref[...]
        b4 = _mm(wpw_ref, acc)
        total = total + jnp.maximum(b4 + t4_ref[...], 0.0)

        out_ref[0] = total.astype(out_ref.dtype)

    return kernel


# ---------------------------------------------------------------------------
# forward wrapper
# ---------------------------------------------------------------------------
def up_forward(x, p):
    """Pallas forward for Up(in_channels, out_channels, bilinear=False)."""
    N, C_in, H, W = x.shape
    C_mid = C_in // 2
    C_out = p["conv0_w"].shape[0]
    x = x.astype(F32)

    PH = PW = 3                                # max halo over all branches
    wp = W + 2 * PW
    hp = H + 2 * PH
    base = PH * wp + PW
    l_out = _round_up(H * wp, 128)             # lane-dense output block

    plan1 = _chain_plan([(1, 1)], [(0, 0)], base, wp, l_out)
    plan2 = _chain_plan([(3, 3), (3, 3)], [(1, 1), (1, 1)], base, wp, l_out)
    plan3 = _chain_plan([(1, 7), (7, 1)], [(0, 3), (3, 0)], base, wp, l_out)
    plan4 = _chain_plan([(3, 3), (1, 1)], [(1, 1), (0, 0)], base, wp, l_out)

    l_xr = max(base + l_out, plan1[1][0], plan2[1][0], plan3[1][0], plan4[1][0])
    assert l_xr >= hp * wp
    l_x = l_xr + wp + 1                        # composed-conv tap reach (offsets 0..wp+1)

    # ---- fold ConvTranspose2d + conv0 + BN0 into one 2x2 conv + shift map ----
    kc = _compose_up_conv0(p["up_w"], p["conv0_w"])           # (C_out, C_in, 2, 2)
    s0, t0 = _bn_affine(p["bn0_gamma"], p["bn0_beta"], p["bn0_mean"], p["bn0_var"])
    kc_stack = s0 * _stack_w(kc)                              # BN scale folded in
    # up-bias pushed through conv0 (border-dependent constant) + BN shift
    b_img = jnp.broadcast_to(p["up_b"].astype(F32)[None, :, None, None],
                             (1, C_mid, 2 * H, 2 * W))
    bmap = lax.conv_general_dilated(
        b_img, p["conv0_w"].astype(F32), (2, 2), [(1, 1), (1, 1)],
        dimension_numbers=("NCHW", "OIHW", "NCHW"), precision=_REF_PREC)[0]
    s0_img = s0[:, :, None] * bmap + t0[:, :, None]           # (C_out, H, W)
    s0_flat = jnp.zeros((C_out, hp, wp), F32).at[:, PH:PH + H, PW:PW + W].set(
        s0_img).reshape(C_out, hp * wp)
    s0_flat = jnp.pad(s0_flat, ((0, 0), (0, l_xr - hp * wp)))

    # ---- validity masks (PyTorch zero-pad semantics for xr and the 3x3->3x3 mid) ----
    m_xr = _valid_mask(0, l_xr, wp, PH, PW, H, W)
    m_h2 = _valid_mask(plan2[2][1], plan2[1][1], wp, PH, PW, H, W)

    # ---- branch weights: tap-stacked, BN scale + conv biases folded ----
    s1, t1 = _bn_affine(p["bn1_gamma"], p["bn1_beta"], p["bn1_mean"], p["bn1_var"],
                        p["conv1_b"])
    w1 = s1 * _stack_w(p["conv1_w"])

    s2, t2 = _bn_affine(p["bn2_gamma"], p["bn2_beta"], p["bn2_mean"], p["bn2_var"])
    w2a = _stack_w(p["conv2a_w"])
    w2b = s2 * _stack_w(p["conv2b_w"])

    s3, t3 = _bn_affine(p["bn3_gamma"], p["bn3_beta"], p["bn3_mean"], p["bn3_var"])
    w3a = _stack_w(p["conv3a_w"])
    w3b = s3 * _stack_w(p["conv3b_w"])

    s4, t4 = _bn_affine(p["bn4_gamma"], p["bn4_beta"], p["bn4_mean"], p["bn4_var"],
                        p["conv4pw_b"])
    wdw = jnp.transpose(p["conv4dw_w"].astype(F32), (2, 3, 0, 1)).reshape(9, C_out, 1)
    bdw = p["conv4dw_b"].astype(F32).reshape(C_out, 1)
    wpw = s4 * p["conv4pw_w"].astype(F32).reshape(C_out, C_out)

    # ---- flatten the original input onto the shared padded grid ----
    x_img = jnp.pad(x, ((0, 0), (0, 0), (PH, PH), (PW, PW)))
    x_src = jnp.pad(x_img.reshape(N, C_in, hp * wp),
                    ((0, 0), (0, 0), (wp + 1, l_x - (wp + 1) - hp * wp)))

    kernel = _make_up_kernel(
        offs_x=(0, 1, wp, wp + 1), l_xr=l_xr, base=base, l_out=l_out,
        offs1=plan1[0][0],
        offs2a=plan2[0][0], offs2b=plan2[0][1], len_h2=plan2[1][1],
        offs3a=plan3[0][0], offs3b=plan3[0][1], len_h3=plan3[1][1],
        offs4dw=plan4[0][0])

    args = (x_src, kc_stack, s0_flat, m_xr,
            w1, t1, w2a, w2b, m_h2, t2, w3a, w3b, t3, wdw, bdw, wpw, t4)
    in_specs = [pl.BlockSpec((1, C_in, l_x), lambda n: (n, 0, 0))]
    in_specs += [_const_spec(a) for a in args[1:]]

    out = pl.pallas_call(
        kernel,
        grid=(N,),
        in_specs=in_specs,
        out_specs=pl.BlockSpec((1, C_out, l_out), lambda n: (n, 0, 0)),
        out_shape=jax.ShapeDtypeStruct((N, C_out, l_out), F32),
        compiler_params=pltpu.CompilerParams(
            dimension_semantics=("parallel",),
            vmem_limit_bytes=48 * 1024 * 1024),
    )(*args)

    return out[:, :, :H * wp].reshape(N, C_out, H, wp)[:, :, :, :W]


# ---------------------------------------------------------------------------
# self-test
# ---------------------------------------------------------------------------
if __name__ == "__main__":
    N, C_in, H0, W0 = 2, 16, 8, 8
    C_out = 16
    C_mid = C_in // 2

    keys = iter(jax.random.split(jax.random.PRNGKey(0), 40))

    def rnd(shape, scale=0.1):
        return jax.random.normal(next(keys), shape, dtype=jnp.float32) * scale

    def bn_params(prefix, c):
        return {f"{prefix}_gamma": 1.0 + rnd((c,)),
                f"{prefix}_beta": rnd((c,)),
                f"{prefix}_mean": rnd((c,)),
                f"{prefix}_var": jnp.abs(rnd((c,))) + 0.5}

    p = {"up_w": rnd((C_in, C_mid, 2, 2)), "up_b": rnd((C_mid,)),
         "conv0_w": rnd((C_out, C_mid, 3, 3))}
    p.update(bn_params("bn0", C_out))
    p.update({"conv1_w": rnd((C_out, C_out, 1, 1)), "conv1_b": rnd((C_out,))})
    p.update(bn_params("bn1", C_out))
    p.update({"conv2a_w": rnd((C_out, C_out, 3, 3)),
              "conv2b_w": rnd((C_out, C_out, 3, 3))})
    p.update(bn_params("bn2", C_out))
    p.update({"conv3a_w": rnd((C_out, C_out, 1, 7)),
              "conv3b_w": rnd((C_out, C_out, 7, 1))})
    p.update(bn_params("bn3", C_out))
    p.update({"conv4dw_w": rnd((C_out, 1, 3, 3)), "conv4dw_b": rnd((C_out,)),
              "conv4pw_w": rnd((C_out, C_out, 1, 1)), "conv4pw_b": rnd((C_out,))})
    p.update(bn_params("bn4", C_out))

    x = jax.random.normal(next(keys), (N, C_in, H0, W0), dtype=jnp.float32)

    out = jax.jit(up_forward)(x, p)
    jax.block_until_ready(out)

    # ----------- pure-JAX reference (same math as the PyTorch forward) -----------
    def conv_ref(z, w, b=None, stride=(1, 1), padding=(0, 0), groups=1):
        o = lax.conv_general_dilated(
            z, w, window_strides=stride,
            padding=[(padding[0], padding[0]), (padding[1], padding[1])],
            dimension_numbers=("NCHW", "OIHW", "NCHW"),
            feature_group_count=groups, precision=_REF_PREC)
        return o if b is None else o + b[None, :, None, None]

    def bn_ref(z, prefix):
        s = p[f"{prefix}_gamma"] / jnp.sqrt(p[f"{prefix}_var"] + _BN_EPS)
        return (s[None, :, None, None] * (z - p[f"{prefix}_mean"][None, :, None, None])
                + p[f"{prefix}_beta"][None, :, None, None])

    relu = lambda z: jnp.maximum(z, 0.0)

    t6 = jnp.einsum("nchw,coij->nohiwj", x, p["up_w"], precision=_REF_PREC)
    x_up_ref = t6.reshape(N, C_mid, 2 * H0, 2 * W0) + p["up_b"][None, :, None, None]

    xr = relu(bn_ref(conv_ref(x_up_ref, p["conv0_w"], None, (2, 2), (1, 1)), "bn0"))
    x1r = relu(bn_ref(conv_ref(xr, p["conv1_w"], p["conv1_b"]), "bn1"))
    x2r = relu(bn_ref(conv_ref(conv_ref(xr, p["conv2a_w"], None, (1, 1), (1, 1)),
                               p["conv2b_w"], None, (1, 1), (1, 1)), "bn2"))
    x3r = relu(bn_ref(conv_ref(conv_ref(xr, p["conv3a_w"], None, (1, 1), (0, 3)),
                               p["conv3b_w"], None, (1, 1), (3, 0)), "bn3"))
    x4r = relu(bn_ref(conv_ref(conv_ref(xr, p["conv4dw_w"], p["conv4dw_b"],
                                        (1, 1), (1, 1), groups=C_out),
                               p["conv4pw_w"], p["conv4pw_b"]), "bn4"))
    ref = xr + x1r + x2r + x3r + x4r

    assert out.shape == ref.shape, (out.shape, ref.shape)
    err = float(jnp.max(jnp.abs(out - ref)))
    assert jnp.allclose(out, ref, atol=3e-2, rtol=3e-2), f"max abs err {err}"
    print("KERNEL_OK")
</pallas_src>

<mosaic_0001>
module attributes {stable_mosaic.version = 11 : i64} {
  func.func @kernel(%arg0: i32, %arg1: memref<1x16x233xf32, #tpu.memory_space<vmem>>, %arg2: memref<16x64xf32, #tpu.memory_space<vmem>>, %arg3: memref<16x218xf32, #tpu.memory_space<vmem>>, %arg4: memref<1x218xf32, #tpu.memory_space<vmem>>, %arg5: memref<16x16xf32, #tpu.memory_space<vmem>>, %arg6: memref<16x1xf32, #tpu.memory_space<vmem>>, %arg7: memref<16x144xf32, #tpu.memory_space<vmem>>, %arg8: memref<16x144xf32, #tpu.memory_space<vmem>>, %arg9: memref<1x158xf32, #tpu.memory_space<vmem>>, %arg10: memref<16x1xf32, #tpu.memory_space<vmem>>, %arg11: memref<16x112xf32, #tpu.memory_space<vmem>>, %arg12: memref<16x112xf32, #tpu.memory_space<vmem>>, %arg13: memref<16x1xf32, #tpu.memory_space<vmem>>, %arg14: memref<9x16x1xf32, #tpu.memory_space<vmem>>, %arg15: memref<16x1xf32, #tpu.memory_space<vmem>>, %arg16: memref<16x16xf32, #tpu.memory_space<vmem>>, %arg17: memref<16x1xf32, #tpu.memory_space<vmem>>, %arg18: memref<1x16x128xf32, #tpu.memory_space<vmem>>) attributes {dimension_semantics = [#tpu.dimension_semantics<parallel>], iteration_bounds = array<i64: 2>, scalar_prefetch = 0 : i64, scratch_operands = 0 : i64, tpu.core_type = #tpu.core_type<tc>, window_params = [{transform_indices = @transform_0, window_bounds = array<i64: 1, 16, 233>}, {pipeline_mode = #tpu.pipeline_mode<synchronous>, transform_indices = @transform_1, window_bounds = array<i64: 16, 64>}, {pipeline_mode = #tpu.pipeline_mode<synchronous>, transform_indices = @transform_2, window_bounds = array<i64: 16, 218>}, {pipeline_mode = #tpu.pipeline_mode<synchronous>, transform_indices = @transform_3, window_bounds = array<i64: 1, 218>}, {pipeline_mode = #tpu.pipeline_mode<synchronous>, transform_indices = @transform_4, window_bounds = array<i64: 16, 16>}, {pipeline_mode = #tpu.pipeline_mode<synchronous>, transform_indices = @transform_5, window_bounds = array<i64: 16, 1>}, {pipeline_mode = #tpu.pipeline_mode<synchronous>, transform_indices = @transform_6, window_bounds = array<i64: 16, 144>}, {pipeline_mode = #tpu.pipeline_mode<synchronous>, transform_indices = @transform_7, window_bounds = array<i64: 16, 144>}, {pipeline_mode = #tpu.pipeline_mode<synchronous>, transform_indices = @transform_8, window_bounds = array<i64: 1, 158>}, {pipeline_mode = #tpu.pipeline_mode<synchronous>, transform_indices = @transform_9, window_bounds = array<i64: 16, 1>}, {pipeline_mode = #tpu.pipeline_mode<synchronous>, transform_indices = @transform_10, window_bounds = array<i64: 16, 112>}, {pipeline_mode = #tpu.pipeline_mode<synchronous>, transform_indices = @transform_11, window_bounds = array<i64: 16, 112>}, {pipeline_mode = #tpu.pipeline_mode<synchronous>, transform_indices = @transform_12, window_bounds = array<i64: 16, 1>}, {pipeline_mode = #tpu.pipeline_mode<synchronous>, transform_indices = @transform_13, window_bounds = array<i64: 9, 16, 1>}, {pipeline_mode = #tpu.pipeline_mode<synchronous>, transform_indices = @transform_14, window_bounds = array<i64: 16, 1>}, {pipeline_mode = #tpu.pipeline_mode<synchronous>, transform_indices = @transform_15, window_bounds = array<i64: 16, 16>}, {pipeline_mode = #tpu.pipeline_mode<synchronous>, transform_indices = @transform_16, window_bounds = array<i64: 16, 1>}, {transform_indices = @transform_17, window_bounds = array<i64: 1, 16, 128>}]} {
    %c0 = arith.constant 0 : index
    %c0_0 = arith.constant 0 : index
    %c0_1 = arith.constant 0 : index
    %0 = vector.load %arg1[%c0, %c0_0, %c0_1] : memref<1x16x233xf32, #tpu.memory_space<vmem>>, vector<1x16x233xf32>
    %1 = vector.shape_cast %0 : vector<1x16x233xf32> to vector<16x233xf32>
    %2 = vector.extract_strided_slice %1 {offsets = [0, 0], sizes = [16, 218], strides = [1, 1]} : vector<16x233xf32> to vector<16x218xf32>
    %3 = vector.extract_strided_slice %1 {offsets = [0, 1], sizes = [16, 218], strides = [1, 1]} : vector<16x233xf32> to vector<16x218xf32>
    %4 = vector.extract_strided_slice %1 {offsets = [0, 14], sizes = [16, 218], strides = [1, 1]} : vector<16x233xf32> to vector<16x218xf32>
    %5 = vector.extract_strided_slice %1 {offsets = [0, 15], sizes = [16, 218], strides = [1, 1]} : vector<16x233xf32> to vector<16x218xf32>
    %6 = tpu.concatenate %2, %3, %4, %5 in 0 : vector<16x218xf32>, vector<16x218xf32>, vector<16x218xf32>, vector<16x218xf32> -> vector<64x218xf32>
    %c0_2 = arith.constant 0 : index
    %c0_3 = arith.constant 0 : index
    %7 = vector.load %arg2[%c0_2, %c0_3] : memref<16x64xf32, #tpu.memory_space<vmem>>, vector<16x64xf32>
    %cst = arith.constant dense<0.000000e+00> : vector<16x218xf32>
    %8 = tpu.matmul %7, %6, %cst {dimension_numbers = #tpu.dot_dimension_numbers<[1], [0], [0], [1], [0, 0, 1, 1], [], []>} : vector<16x64xf32>, vector<64x218xf32>, vector<16x218xf32> -> vector<16x218xf32>
    %c0_4 = arith.constant 0 : index
    %c0_5 = arith.constant 0 : index
    %9 = vector.load %arg3[%c0_4, %c0_5] : memref<16x218xf32, #tpu.memory_space<vmem>>, vector<16x218xf32>
    %10 = arith.addf %8, %9 : vector<16x218xf32>
    %cst_6 = arith.constant 0.000000e+00 : f32
    %11 = vector.broadcast %cst_6 : f32 to vector<16x218xf32>
    %12 = arith.maximumf %10, %11 : vector<16x218xf32>
    %c0_7 = arith.constant 0 : index
    %c0_8 = arith.constant 0 : index
    %13 = vector.load %arg4[%c0_7, %c0_8] : memref<1x218xf32, #tpu.memory_space<vmem>>, vector<1x218xf32>
    %14 = vector.broadcast %13 : vector<1x218xf32> to vector<16x218xf32>
    %15 = arith.mulf %12, %14 : vector<16x218xf32>
    %16 = vector.extract_strided_slice %15 {offsets = [0, 45], sizes = [16, 128], strides = [1, 1]} : vector<16x218xf32> to vector<16x128xf32>
    %17 = vector.extract_strided_slice %15 {offsets = [0, 45], sizes = [16, 128], strides = [1, 1]} : vector<16x218xf32> to vector<16x128xf32>
    %c0_9 = arith.constant 0 : index
    %c0_10 = arith.constant 0 : index
    %18 = vector.load %arg5[%c0_9, %c0_10] : memref<16x16xf32, #tpu.memory_space<vmem>>, vector<16x16xf32>
    %cst_11 = arith.constant dense<0.000000e+00> : vector<16x128xf32>
    %19 = tpu.matmul %18, %17, %cst_11 {dimension_numbers = #tpu.dot_dimension_numbers<[1], [0], [0], [1], [0, 0, 1, 1], [], []>} : vector<16x16xf32>, vector<16x128xf32>, vector<16x128xf32> -> vector<16x128xf32>
    %c0_12 = arith.constant 0 : index
    %c0_13 = arith.constant 0 : index
    %20 = vector.load %arg6[%c0_12, %c0_13] : memref<16x1xf32, #tpu.memory_space<vmem>>, vector<16x1xf32>
    %21 = vector.broadcast %20 : vector<16x1xf32> to vector<16x128xf32>
    %22 = arith.addf %19, %21 : vector<16x128xf32>
    %cst_14 = arith.constant 0.000000e+00 : f32
    %23 = vector.broadcast %cst_14 : f32 to vector<16x128xf32>
    %24 = arith.maximumf %22, %23 : vector<16x128xf32>
    %25 = arith.addf %16, %24 : vector<16x128xf32>
    %26 = vector.extract_strided_slice %15 {offsets = [0, 15], sizes = [16, 158], strides = [1, 1]} : vector<16x218xf32> to vector<16x158xf32>
    %27 = vector.extract_strided_slice %15 {offsets = [0, 16], sizes = [16, 158], strides = [1, 1]} : vector<16x218xf32> to vector<16x158xf32>
    %28 = vector.extract_strided_slice %15 {offsets = [0, 17], sizes = [16, 158], strides = [1, 1]} : vector<16x218xf32> to vector<16x158xf32>
    %29 = vector.extract_strided_slice %15 {offsets = [0, 29], sizes = [16, 158], strides = [1, 1]} : vector<16x218xf32> to vector<16x158xf32>
    %30 = vector.extract_strided_slice %15 {offsets = [0, 30], sizes = [16, 158], strides = [1, 1]} : vector<16x218xf32> to vector<16x158xf32>
    %31 = vector.extract_strided_slice %15 {offsets = [0, 31], sizes = [16, 158], strides = [1, 1]} : vector<16x218xf32> to vector<16x158xf32>
    %32 = vector.extract_strided_slice %15 {offsets = [0, 43], sizes = [16, 158], strides = [1, 1]} : vector<16x218xf32> to vector<16x158xf32>
    %33 = vector.extract_strided_slice %15 {offsets = [0, 44], sizes = [16, 158], strides = [1, 1]} : vector<16x218xf32> to vector<16x158xf32>
    %34 = vector.extract_strided_slice %15 {offsets = [0, 45], sizes = [16, 158], strides = [1, 1]} : vector<16x218xf32> to vector<16x158xf32>
    %35 = tpu.concatenate %26, %27, %28, %29, %30, %31, %32, %33, %34 in 0 : vector<16x158xf32>, vector<16x158xf32>, vector<16x158xf32>, vector<16x158xf32>, vector<16x158xf32>, vector<16x158xf32>, vector<16x158xf32>, vector<16x158xf32>, vector<16x158xf32> -> vector<144x158xf32>
    %c0_15 = arith.constant 0 : index
    %c0_16 = arith.constant 0 : index
    %36 = vector.load %arg7[%c0_15, %c0_16] : memref<16x144xf32, #tpu.memory_space<vmem>>, vector<16x144xf32>
    %cst_17 = arith.constant dense<0.000000e+00> : vector<16x158xf32>
    %37 = tpu.matmul %36, %35, %cst_17 {dimension_numbers = #tpu.dot_dimension_numbers<[1], [0], [0], [1], [0, 0, 1, 1], [], []>} : vector<16x144xf32>, vector<144x158xf32>, vector<16x158xf32> -> vector<16x158xf32>
    %c0_18 = arith.constant 0 : index
    %c0_19 = arith.constant 0 : index
    %38 = vector.load %arg9[%c0_18, %c0_19] : memref<1x158xf32, #tpu.memory_space<vmem>>, vector<1x158xf32>
    %39 = vector.broadcast %38 : vector<1x158xf32> to vector<16x158xf32>
    %40 = arith.mulf %37, %39 : vector<16x158xf32>
    %41 = vector.extract_strided_slice %40 {offsets = [0, 0], sizes = [16, 128], strides = [1, 1]} : vector<16x158xf32> to vector<16x128xf32>
    %42 = vector.extract_strided_slice %40 {offsets = [0, 1], sizes = [16, 128], strides = [1, 1]} : vector<16x158xf32> to vector<16x128xf32>
    %43 = vector.extract_strided_slice %40 {offsets = [0, 2], sizes = [16, 128], strides = [1, 1]} : vector<16x158xf32> to vector<16x128xf32>
    %44 = vector.extract_strided_slice %40 {offsets = [0, 14], sizes = [16, 128], strides = [1, 1]} : vector<16x158xf32> to vector<16x128xf32>
    %45 = vector.extract_strided_slice %40 {offsets = [0, 15], sizes = [16, 128], strides = [1, 1]} : vector<16x158xf32> to vector<16x128xf32>
    %46 = vector.extract_strided_slice %40 {offsets = [0, 16], sizes = [16, 128], strides = [1, 1]} : vector<16x158xf32> to vector<16x128xf32>
    %47 = vector.extract_strided_slice %40 {offsets = [0, 28], sizes = [16, 128], strides = [1, 1]} : vector<16x158xf32> to vector<16x128xf32>
    %48 = vector.extract_strided_slice %40 {offsets = [0, 29], sizes = [16, 128], strides = [1, 1]} : vector<16x158xf32> to vector<16x128xf32>
    %49 = vector.extract_strided_slice %40 {offsets = [0, 30], sizes = [16, 128], strides = [1, 1]} : vector<16x158xf32> to vector<16x128xf32>
    %50 = tpu.concatenate %41, %42, %43, %44, %45, %46, %47, %48, %49 in 0 : vector<16x128xf32>, vector<16x128xf32>, vector<16x128xf32>, vector<16x128xf32>, vector<16x128xf32>, vector<16x128xf32>, vector<16x128xf32>, vector<16x128xf32>, vector<16x128xf32> -> vector<144x128xf32>
    %c0_20 = arith.constant 0 : index
    %c0_21 = arith.constant 0 : index
    %51 = vector.load %arg8[%c0_20, %c0_21] : memref<16x144xf32, #tpu.memory_space<vmem>>, vector<16x144xf32>
    %cst_22 = arith.constant dense<0.000000e+00> : vector<16x128xf32>
    %52 = tpu.matmul %51, %50, %cst_22 {dimension_numbers = #tpu.dot_dimension_numbers<[1], [0], [0], [1], [0, 0, 1, 1], [], []>} : vector<16x144xf32>, vector<144x128xf32>, vector<16x128xf32> -> vector<16x128xf32>
    %c0_23 = arith.constant 0 : index
    %c0_24 = arith.constant 0 : index
    %53 = vector.load %arg10[%c0_23, %c0_24] : memref<16x1xf32, #tpu.memory_space<vmem>>, vector<16x1xf32>
    %54 = vector.broadcast %53 : vector<16x1xf32> to vector<16x128xf32>
    %55 = arith.addf %52, %54 : vector<16x128xf32>
    %cst_25 = arith.constant 0.000000e+00 : f32
    %56 = vector.broadcast %cst_25 : f32 to vector<16x128xf32>
    %57 = arith.maximumf %55, %56 : vector<16x128xf32>
    %58 = arith.addf %25, %57 : vector<16x128xf32>
    %59 = vector.extract_strided_slice %15 {offsets = [0, 0], sizes = [16, 212], strides = [1, 1]} : vector<16x218xf32> to vector<16x212xf32>
    %60 = vector.extract_strided_slice %15 {offsets = [0, 1], sizes = [16, 212], strides = [1, 1]} : vector<16x218xf32> to vector<16x212xf32>
    %61 = vector.extract_strided_slice %15 {offsets = [0, 2], sizes = [16, 212], strides = [1, 1]} : vector<16x218xf32> to vector<16x212xf32>
    %62 = vector.extract_strided_slice %15 {offsets = [0, 3], sizes = [16, 212], strides = [1, 1]} : vector<16x218xf32> to vector<16x212xf32>
    %63 = vector.extract_strided_slice %15 {offsets = [0, 4], sizes = [16, 212], strides = [1, 1]} : vector<16x218xf32> to vector<16x212xf32>
    %64 = vector.extract_strided_slice %15 {offsets = [0, 5], sizes = [16, 212], strides = [1, 1]} : vector<16x218xf32> to vector<16x212xf32>
    %65 = vector.extract_strided_slice %15 {offsets = [0, 6], sizes = [16, 212], strides = [1, 1]} : vector<16x218xf32> to vector<16x212xf32>
    %66 = tpu.concatenate %59, %60, %61, %62, %63, %64, %65 in 0 : vector<16x212xf32>, vector<16x212xf32>, vector<16x212xf32>, vector<16x212xf32>, vector<16x212xf32>, vector<16x212xf32>, vector<16x212xf32> -> vector<112x212xf32>
    %c0_26 = arith.constant 0 : index
    %c0_27 = arith.constant 0 : index
    %67 = vector.load %arg11[%c0_26, %c0_27] : memref<16x112xf32, #tpu.memory_space<vmem>>, vector<16x112xf32>
    %cst_28 = arith.constant dense<0.000000e+00> : vector<16x212xf32>
    %68 = tpu.matmul %67, %66, %cst_28 {dimension_numbers = #tpu.dot_dimension_numbers<[1], [0], [0], [1], [0, 0, 1, 1], [], []>} : vector<16x112xf32>, vector<112x212xf32>, vector<16x212xf32> -> vector<16x212xf32>
    %69 = vector.extract_strided_slice %68 {offsets = [0, 0], sizes = [16, 128], strides = [1, 1]} : vector<16x212xf32> to vector<16x128xf32>
    %70 = vector.extract_strided_slice %68 {offsets = [0, 14], sizes = [16, 128], strides = [1, 1]} : vector<16x212xf32> to vector<16x128xf32>
    %71 = vector.extract_strided_slice %68 {offsets = [0, 28], sizes = [16, 128], strides = [1, 1]} : vector<16x212xf32> to vector<16x128xf32>
    %72 = vector.extract_strided_slice %68 {offsets = [0, 42], sizes = [16, 128], strides = [1, 1]} : vector<16x212xf32> to vector<16x128xf32>
    %73 = vector.extract_strided_slice %68 {offsets = [0, 56], sizes = [16, 128], strides = [1, 1]} : vector<16x212xf32> to vector<16x128xf32>
    %74 = vector.extract_strided_slice %68 {offsets = [0, 70], sizes = [16, 128], strides = [1, 1]} : vector<16x212xf32> to vector<16x128xf32>
    %75 = vector.extract_strided_slice %68 {offsets = [0, 84], sizes = [16, 128], strides = [1, 1]} : vector<16x212xf32> to vector<16x128xf32>
    %76 = tpu.concatenate %69, %70, %71, %72, %73, %74, %75 in 0 : vector<16x128xf32>, vector<16x128xf32>, vector<16x128xf32>, vector<16x128xf32>, vector<16x128xf32>, vector<16x128xf32>, vector<16x128xf32> -> vector<112x128xf32>
    %c0_29 = arith.constant 0 : index
    %c0_30 = arith.constant 0 : index
    %77 = vector.load %arg12[%c0_29, %c0_30] : memref<16x112xf32, #tpu.memory_space<vmem>>, vector<16x112xf32>
    %cst_31 = arith.constant dense<0.000000e+00> : vector<16x128xf32>
    %78 = tpu.matmul %77, %76, %cst_31 {dimension_numbers = #tpu.dot_dimension_numbers<[1], [0], [0], [1], [0, 0, 1, 1], [], []>} : vector<16x112xf32>, vector<112x128xf32>, vector<16x128xf32> -> vector<16x128xf32>
    %c0_32 = arith.constant 0 : index
    %c0_33 = arith.constant 0 : index
    %79 = vector.load %arg13[%c0_32, %c0_33] : memref<16x1xf32, #tpu.memory_space<vmem>>, vector<16x1xf32>
    %80 = vector.broadcast %79 : vector<16x1xf32> to vector<16x128xf32>
    %81 = arith.addf %78, %80 : vector<16x128xf32>
    %cst_34 = arith.constant 0.000000e+00 : f32
    %82 = vector.broadcast %cst_34 : f32 to vector<16x128xf32>
    %83 = arith.maximumf %81, %82 : vector<16x128xf32>
    %84 = arith.addf %58, %83 : vector<16x128xf32>
    %c0_35 = arith.constant 0 : index
    %c0_36 = arith.constant 0 : index
    %c0_37 = arith.constant 0 : index
    %85 = vector.load %arg14[%c0_35, %c0_36, %c0_37] : memref<9x16x1xf32, #tpu.memory_space<vmem>>, vector<1x16x1xf32>
    %86 = vector.shape_cast %85 : vector<1x16x1xf32> to vector<16x1xf32>
    %87 = vector.extract_strided_slice %15 {offsets = [0, 30], sizes = [16, 128], strides = [1, 1]} : vector<16x218xf32> to vector<16x128xf32>
    %88 = vector.broadcast %86 : vector<16x1xf32> to vector<16x128xf32>
    %89 = arith.mulf %88, %87 : vector<16x128xf32>
    %c1 = arith.constant 1 : index
    %c0_38 = arith.constant 0 : index
    %c0_39 = arith.constant 0 : index
    %90 = vector.load %arg14[%c1, %c0_38, %c0_39] : memref<9x16x1xf32, #tpu.memory_space<vmem>>, vector<1x16x1xf32>
    %91 = vector.shape_cast %90 : vector<1x16x1xf32> to vector<16x1xf32>
    %92 = vector.extract_strided_slice %15 {offsets = [0, 31], sizes = [16, 128], strides = [1, 1]} : vector<16x218xf32> to vector<16x128xf32>
    %93 = vector.broadcast %91 : vector<16x1xf32> to vector<16x128xf32>
    %94 = arith.mulf %93, %92 : vector<16x128xf32>
    %95 = arith.addf %89, %94 : vector<16x128xf32>
    %c2 = arith.constant 2 : index
    %c0_40 = arith.constant 0 : index
    %c0_41 = arith.constant 0 : index
    %96 = vector.load %arg14[%c2, %c0_40, %c0_41] : memref<9x16x1xf32, #tpu.memory_space<vmem>>, vector<1x16x1xf32>
    %97 = vector.shape_cast %96 : vector<1x16x1xf32> to vector<16x1xf32>
    %98 = vector.extract_strided_slice %15 {offsets = [0, 32], sizes = [16, 128], strides = [1, 1]} : vector<16x218xf32> to vector<16x128xf32>
    %99 = vector.broadcast %97 : vector<16x1xf32> to vector<16x128xf32>
    %100 = arith.mulf %99, %98 : vector<16x128xf32>
    %101 = arith.addf %95, %100 : vector<16x128xf32>
    %c3 = arith.constant 3 : index
    %c0_42 = arith.constant 0 : index
    %c0_43 = arith.constant 0 : index
    %102 = vector.load %arg14[%c3, %c0_42, %c0_43] : memref<9x16x1xf32, #tpu.memory_space<vmem>>, vector<1x16x1xf32>
    %103 = vector.shape_cast %102 : vector<1x16x1xf32> to vector<16x1xf32>
    %104 = vector.extract_strided_slice %15 {offsets = [0, 44], sizes = [16, 128], strides = [1, 1]} : vector<16x218xf32> to vector<16x128xf32>
    %105 = vector.broadcast %103 : vector<16x1xf32> to vector<16x128xf32>
    %106 = arith.mulf %105, %104 : vector<16x128xf32>
    %107 = arith.addf %101, %106 : vector<16x128xf32>
    %c4 = arith.constant 4 : index
    %c0_44 = arith.constant 0 : index
    %c0_45 = arith.constant 0 : index
    %108 = vector.load %arg14[%c4, %c0_44, %c0_45] : memref<9x16x1xf32, #tpu.memory_space<vmem>>, vector<1x16x1xf32>
    %109 = vector.shape_cast %108 : vector<1x16x1xf32> to vector<16x1xf32>
    %110 = vector.extract_strided_slice %15 {offsets = [0, 45], sizes = [16, 128], strides = [1, 1]} : vector<16x218xf32> to vector<16x128xf32>
    %111 = vector.broadcast %109 : vector<16x1xf32> to vector<16x128xf32>
    %112 = arith.mulf %111, %110 : vector<16x128xf32>
    %113 = arith.addf %107, %112 : vector<16x128xf32>
    %c5 = arith.constant 5 : index
    %c0_46 = arith.constant 0 : index
    %c0_47 = arith.constant 0 : index
    %114 = vector.load %arg14[%c5, %c0_46, %c0_47] : memref<9x16x1xf32, #tpu.memory_space<vmem>>, vector<1x16x1xf32>
    %115 = vector.shape_cast %114 : vector<1x16x1xf32> to vector<16x1xf32>
    %116 = vector.extract_strided_slice %15 {offsets = [0, 46], sizes = [16, 128], strides = [1, 1]} : vector<16x218xf32> to vector<16x128xf32>
    %117 = vector.broadcast %115 : vector<16x1xf32> to vector<16x128xf32>
    %118 = arith.mulf %117, %116 : vector<16x128xf32>
    %119 = arith.addf %113, %118 : vector<16x128xf32>
    %c6 = arith.constant 6 : index
    %c0_48 = arith.constant 0 : index
    %c0_49 = arith.constant 0 : index
    %120 = vector.load %arg14[%c6, %c0_48, %c0_49] : memref<9x16x1xf32, #tpu.memory_space<vmem>>, vector<1x16x1xf32>
    %121 = vector.shape_cast %120 : vector<1x16x1xf32> to vector<16x1xf32>
    %122 = vector.extract_strided_slice %15 {offsets = [0, 58], sizes = [16, 128], strides = [1, 1]} : vector<16x218xf32> to vector<16x128xf32>
    %123 = vector.broadcast %121 : vector<16x1xf32> to vector<16x128xf32>
    %124 = arith.mulf %123, %122 : vector<16x128xf32>
    %125 = arith.addf %119, %124 : vector<16x128xf32>
    %c7 = arith.constant 7 : index
    %c0_50 = arith.constant 0 : index
    %c0_51 = arith.constant 0 : index
    %126 = vector.load %arg14[%c7, %c0_50, %c0_51] : memref<9x16x1xf32, #tpu.memory_space<vmem>>, vector<1x16x1xf32>
    %127 = vector.shape_cast %126 : vector<1x16x1xf32> to vector<16x1xf32>
    %128 = vector.extract_strided_slice %15 {offsets = [0, 59], sizes = [16, 128], strides = [1, 1]} : vector<16x218xf32> to vector<16x128xf32>
    %129 = vector.broadcast %127 : vector<16x1xf32> to vector<16x128xf32>
    %130 = arith.mulf %129, %128 : vector<16x128xf32>
    %131 = arith.addf %125, %130 : vector<16x128xf32>
    %c8 = arith.constant 8 : index
    %c0_52 = arith.constant 0 : index
    %c0_53 = arith.constant 0 : index
    %132 = vector.load %arg14[%c8, %c0_52, %c0_53] : memref<9x16x1xf32, #tpu.memory_space<vmem>>, vector<1x16x1xf32>
    %133 = vector.shape_cast %132 : vector<1x16x1xf32> to vector<16x1xf32>
    %134 = vector.extract_strided_slice %15 {offsets = [0, 60], sizes = [16, 128], strides = [1, 1]} : vector<16x218xf32> to vector<16x128xf32>
    %135 = vector.broadcast %133 : vector<16x1xf32> to vector<16x128xf32>
    %136 = arith.mulf %135, %134 : vector<16x128xf32>
    %137 = arith.addf %131, %136 : vector<16x128xf32>
    %c0_54 = arith.constant 0 : index
    %c0_55 = arith.constant 0 : index
    %138 = vector.load %arg15[%c0_54, %c0_55] : memref<16x1xf32, #tpu.memory_space<vmem>>, vector<16x1xf32>
    %139 = vector.broadcast %138 : vector<16x1xf32> to vector<16x128xf32>
    %140 = arith.addf %137, %139 : vector<16x128xf32>
    %c0_56 = arith.constant 0 : index
    %c0_57 = arith.constant 0 : index
    %141 = vector.load %arg16[%c0_56, %c0_57] : memref<16x16xf32, #tpu.memory_space<vmem>>, vector<16x16xf32>
    %cst_58 = arith.constant dense<0.000000e+00> : vector<16x128xf32>
    %142 = tpu.matmul %141, %140, %cst_58 {dimension_numbers = #tpu.dot_dimension_numbers<[1], [0], [0], [1], [0, 0, 1, 1], [], []>} : vector<16x16xf32>, vector<16x128xf32>, vector<16x128xf32> -> vector<16x128xf32>
    %c0_59 = arith.constant 0 : index
    %c0_60 = arith.constant 0 : index
    %143 = vector.load %arg17[%c0_59, %c0_60] : memref<16x1xf32, #tpu.memory_space<vmem>>, vector<16x1xf32>
    %144 = vector.broadcast %143 : vector<16x1xf32> to vector<16x128xf32>
    %145 = arith.addf %142, %144 : vector<16x128xf32>
    %cst_61 = arith.constant 0.000000e+00 : f32
    %146 = vector.broadcast %cst_61 : f32 to vector<16x128xf32>
    %147 = arith.maximumf %145, %146 : vector<16x128xf32>
    %148 = arith.addf %84, %147 : vector<16x128xf32>
    %c0_62 = arith.constant 0 : index
    %c0_63 = arith.constant 0 : index
    %c0_64 = arith.constant 0 : index
    %149 = vector.load %arg18[%c0_62, %c0_63, %c0_64] : memref<1x16x128xf32, #tpu.memory_space<vmem>>, vector<1x16x128xf32>
    %150 = vector.shape_cast %149 : vector<1x16x128xf32> to vector<16x128xf32>
    %151 = vector.shape_cast %148 : vector<16x128xf32> to vector<1x16x128xf32>
    tpu.vector_store %arg18[%c0_62, %c0_63, %c0_64], %151 {strides = array<i32>} : memref<1x16x128xf32, #tpu.memory_space<vmem>>, vector<1x16x128xf32>,
    return
  }
  func.func @transform_0(%arg0: i32) -> (i32, i32, i32) {
    %c0_i32 = arith.constant 0 : i32
    %c0_i32_0 = arith.constant 0 : i32
    %c0_i32_1 = arith.constant 0 : i32
    return %arg0, %c0_i32, %c0_i32_0 : i32, i32, i32
  }
  func.func @transform_1(%arg0: i32) -> (i32, i32) {
    %c0_i32 = arith.constant 0 : i32
    %c0_i32_0 = arith.constant 0 : i32
    %c0_i32_1 = arith.constant 0 : i32
    return %c0_i32, %c0_i32_0 : i32, i32
  }
  func.func @transform_2(%arg0: i32) -> (i32, i32) {
    %c0_i32 = arith.constant 0 : i32
    %c0_i32_0 = arith.constant 0 : i32
    %c0_i32_1 = arith.constant 0 : i32
    return %c0_i32, %c0_i32_0 : i32, i32
  }
  func.func @transform_3(%arg0: i32) -> (i32, i32) {
    %c0_i32 = arith.constant 0 : i32
    %c0_i32_0 = arith.constant 0 : i32
    %c0_i32_1 = arith.constant 0 : i32
    return %c0_i32, %c0_i32_0 : i32, i32
  }
  func.func @transform_4(%arg0: i32) -> (i32, i32) {
    %c0_i32 = arith.constant 0 : i32
    %c0_i32_0 = arith.constant 0 : i32
    %c0_i32_1 = arith.constant 0 : i32
    return %c0_i32, %c0_i32_0 : i32, i32
  }
  func.func @transform_5(%arg0: i32) -> (i32, i32) {
    %c0_i32 = arith.constant 0 : i32
    %c0_i32_0 = arith.constant 0 : i32
    %c0_i32_1 = arith.constant 0 : i32
    return %c0_i32, %c0_i32_0 : i32, i32
  }
  func.func @transform_6(%arg0: i32) -> (i32, i32) {
    %c0_i32 = arith.constant 0 : i32
    %c0_i32_0 = arith.constant 0 : i32
    %c0_i32_1 = arith.constant 0 : i32
    return %c0_i32, %c0_i32_0 : i32, i32
  }
  func.func @transform_7(%arg0: i32) -> (i32, i32) {
    %c0_i32 = arith.constant 0 : i32
    %c0_i32_0 = arith.constant 0 : i32
    %c0_i32_1 = arith.constant 0 : i32
    return %c0_i32, %c0_i32_0 : i32, i32
  }
  func.func @transform_8(%arg0: i32) -> (i32, i32) {
    %c0_i32 = arith.constant 0 : i32
    %c0_i32_0 = arith.constant 0 : i32
    %c0_i32_1 = arith.constant 0 : i32
    return %c0_i32, %c0_i32_0 : i32, i32
  }
  func.func @transform_9(%arg0: i32) -> (i32, i32) {
    %c0_i32 = arith.constant 0 : i32
    %c0_i32_0 = arith.constant 0 : i32
    %c0_i32_1 = arith.constant 0 : i32
    return %c0_i32, %c0_i32_0 : i32, i32
  }
  func.func @transform_10(%arg0: i32) -> (i32, i32) {
    %c0_i32 = arith.constant 0 : i32
    %c0_i32_0 = arith.constant 0 : i32
    %c0_i32_1 = arith.constant 0 : i32
    return %c0_i32, %c0_i32_0 : i32, i32
  }
  func.func @transform_11(%arg0: i32) -> (i32, i32) {
    %c0_i32 = arith.constant 0 : i32
    %c0_i32_0 = arith.constant 0 : i32
    %c0_i32_1 = arith.constant 0 : i32
    return %c0_i32, %c0_i32_0 : i32, i32
  }
  func.func @transform_12(%arg0: i32) -> (i32, i32) {
    %c0_i32 = arith.constant 0 : i32
    %c0_i32_0 = arith.constant 0 : i32
    %c0_i32_1 = arith.constant 0 : i32
    return %c0_i32, %c0_i32_0 : i32, i32
  }
  func.func @transform_13(%arg0: i32) -> (i32, i32, i32) {
    %c0_i32 = arith.constant 0 : i32
    %c0_i32_0 = arith.constant 0 : i32
    %c0_i32_1 = arith.constant 0 : i32
    %c0_i32_2 = arith.constant 0 : i32
    return %c0_i32, %c0_i32_0, %c0_i32_1 : i32, i32, i32
  }
  func.func @transform_14(%arg0: i32) -> (i32, i32) {
    %c0_i32 = arith.constant 0 : i32
    %c0_i32_0 = arith.constant 0 : i32
    %c0_i32_1 = arith.constant 0 : i32
    return %c0_i32, %c0_i32_0 : i32, i32
  }
  func.func @transform_15(%arg0: i32) -> (i32, i32) {
    %c0_i32 = arith.constant 0 : i32
    %c0_i32_0 = arith.constant 0 : i32
    %c0_i32_1 = arith.constant 0 : i32
    return %c0_i32, %c0_i32_0 : i32, i32
  }
  func.func @transform_16(%arg0: i32) -> (i32, i32) {
    %c0_i32 = arith.constant 0 : i32
    %c0_i32_0 = arith.constant 0 : i32
    %c0_i32_1 = arith.constant 0 : i32
    return %c0_i32, %c0_i32_0 : i32, i32
  }
  func.func @transform_17(%arg0: i32) -> (i32, i32, i32) {
    %c0_i32 = arith.constant 0 : i32
    %c0_i32_0 = arith.constant 0 : i32
    %c0_i32_1 = arith.constant 0 : i32
    return %arg0, %c0_i32, %c0_i32_0 : i32, i32, i32
  }
}

</mosaic_0001>

<llo_original>
// kernel: up_forward.1
$region0: #{up_forward.1}
  #allocation0 [shape = 'u32[]', space=smem, size = 0x4, offset = 0x4, fixed_abs, tag = 'smem constant byte address 0x4 - core index']
  #allocation1 [shape = 'u32[72,128]{1,0:T(1,128)}', space=vmem, size = 0x9000, scoped, tag = 'internal scratch']
  %s0 = inlined_call_operand.vmem [shape: f32[2,16,233], index: 0, kind: input, shape index: {}]
  %s1 = inlined_call_operand.vmem [shape: f32[16,64], index: 1, kind: input, shape index: {}]
  %s2 = inlined_call_operand.vmem [shape: f32[16,218], index: 2, kind: input, shape index: {}]
  %s3 = inlined_call_operand.vmem [shape: f32[1,218], index: 3, kind: input, shape index: {}]
  %s4 = inlined_call_operand.vmem [shape: f32[16,16], index: 4, kind: input, shape index: {}]
  %s5 = inlined_call_operand.vmem [shape: f32[16,1], index: 5, kind: input, shape index: {}]
  %s6 = inlined_call_operand.vmem [shape: f32[16,144], index: 6, kind: input, shape index: {}]
  %s7 = inlined_call_operand.vmem [shape: f32[16,144], index: 7, kind: input, shape index: {}]
  %s8 = inlined_call_operand.vmem [shape: f32[1,158], index: 8, kind: input, shape index: {}]
  %s9 = inlined_call_operand.vmem [shape: f32[16,1], index: 9, kind: input, shape index: {}]
  %s10 = inlined_call_operand.vmem [shape: f32[16,112], index: 10, kind: input, shape index: {}]
  %s11 = inlined_call_operand.vmem [shape: f32[16,112], index: 11, kind: input, shape index: {}]
  %s12 = inlined_call_operand.vmem [shape: f32[16,1], index: 12, kind: input, shape index: {}]
  %s13 = inlined_call_operand.vmem [shape: f32[9,16,1], index: 13, kind: input, shape index: {}]
  %s14 = inlined_call_operand.vmem [shape: f32[16,1], index: 14, kind: input, shape index: {}]
  %s15 = inlined_call_operand.vmem [shape: f32[16,16], index: 15, kind: input, shape index: {}]
  %s16 = inlined_call_operand.vmem [shape: f32[16,1], index: 16, kind: input, shape index: {}]
  %s17 = inlined_call_operand.vmem [shape: f32[2,16,128], index: 17, kind: output, shape index: {}]
  %s18 = sld [smem:[#allocation0]]
  $region101: #{up_forward.1} parent=0
    _
  %s20 = ssub.s32 1, %s18
  %s21 = scalar_select 0, %s20, %s18
  loop: start=0, step=1, limit=4
  $region2: #{up_forward.1} parent=0 // loop_pre_header
    _
  $region3: #{up_forward.1} parent=0 // loop_header
    %s23 = sphi 0, %s27
    %p24 = scmp.ge.s32.totalorder %s23, 4
    %s33 = sphi 0, %s35
    %s36 = sphi 0, %s33
    %s37 = sphi 0, %s36
    %s53 = sphi 0, %s37
    %s57 = sphi 0, %s57
    %s59 = sphi 0, %s57
    %s60 = sphi 0, %s59
    %s74 = sphi 0, %s60
    %s78 = sphi 0, %s78
    %s80 = sphi 0, %s78
    %s81 = sphi 0, %s80
    %s95 = sphi 0, %s81
    %s99 = sphi 0, %s99
    %s101 = sphi 0, %s99
    %s102 = sphi 0, %s101
    %s116 = sphi 0, %s102
    %s120 = sphi 0, %s120
    %s122 = sphi 0, %s120
    %s123 = sphi 0, %s122
    %s137 = sphi 0, %s123
    %s141 = sphi 0, %s141
    %s143 = sphi 0, %s141
    %s144 = sphi 0, %s143
    %s158 = sphi 0, %s144
    %s162 = sphi 0, %s162
    %s164 = sphi 0, %s162
    %s165 = sphi 0, %s164
    %s179 = sphi 0, %s165
    %s183 = sphi 0, %s183
    %s185 = sphi 0, %s183
    %s186 = sphi 0, %s185
    %s200 = sphi 0, %s186
    %s204 = sphi 0, %s204
    %s206 = sphi 0, %s204
    %s207 = sphi 0, %s206
    %s221 = sphi 0, %s207
    %s225 = sphi 0, %s225
    %s227 = sphi 0, %s225
    %s228 = sphi 0, %s227
    %s242 = sphi 0, %s228
    %s246 = sphi 0, %s246
    %s248 = sphi 0, %s246
    %s249 = sphi 0, %s248
    %s263 = sphi 0, %s249
    %s267 = sphi 0, %s267
    %s269 = sphi 0, %s267
    %s270 = sphi 0, %s269
    %s284 = sphi 0, %s270
    %s288 = sphi 0, %s288
    %s290 = sphi 0, %s288
    %s291 = sphi 0, %s290
    %s305 = sphi 0, %s291
    %s309 = sphi 0, %s309
    %s311 = sphi 0, %s309
    %s312 = sphi 0, %s311
    %s326 = sphi 0, %s312
    %s330 = sphi 0, %s330
    %s332 = sphi 0, %s330
    %s333 = sphi 0, %s332
    %s347 = sphi 0, %s333
    %s351 = sphi 0, %s351
    %s353 = sphi 0, %s351
    %s354 = sphi 0, %s353
    %s368 = sphi 0, %s354
    %s372 = sphi 0, %s372
    %s374 = sphi 0, %s372
    %s375 = sphi 0, %s374
    %s389 = sphi 0, %s375
    %s395 = sphi 0, %s397
    %s398 = sphi 0, %s395
    %s399 = sphi 0, %s398
    %s415 = sphi 0, %s399
  $region4: #{up_forward.1} parent=0 // loop_header_branch
    %26 = sbr.rel (%p24) target = $region8
  $region5: #{up_forward.1} parent=0 // loop_body
    %s28 = ssub.s32 %s23, 1
    %s29 = ssub.s32 %s23, 2
    %s30 = sadd.s32 %s23, 1
    %s31 = ssub.s32 %s23, %s30
    %p32 = scmp.eq.s32.totalorder %s31, 0
    %s34 = sadd.s32 %s33, 1
    %s35 = scalar_select %p32, %s33, %s34
    %p38 = pneg %p32
    %p39 = scmp.eq.s32.totalorder %s23, 1
    %p40 = por %p38, %p39
    %p41 = scmp.ne.s32.totalorder %s33, %s36
    %p42 = scmp.eq.s32.totalorder %s23, 0
    %p43 = por %p41, %p42
    %p44 = scmp.ne.s32.totalorder %s33, %s36
    %p45 = scmp.eq.s32.totalorder %s28, 1
    %p46 = por %p44, %p45
    %p47 = scmp.ne.s32.totalorder %s36, %s37
    %p48 = scmp.eq.s32.totalorder %s28, 0
    %p49 = por %p47, %p48
    %p50 = scmp.ne.s32.totalorder %s36, %s37
    %p51 = scmp.eq.s32.totalorder %s29, 1
    %p52 = por %p50, %p51
    %p54 = scmp.ne.s32.totalorder %s37, %s53
    %p55 = scmp.eq.s32.totalorder %s29, 0
    %p56 = por %p54, %p55
    %s58 = sadd.s32 %s57, 1
    %p61 = scmp.eq.s32.totalorder %s23, 1
    %p62 = scmp.ne.s32.totalorder %s57, %s59
    %p63 = scmp.eq.s32.totalorder %s23, 0
    %p64 = por %p62, %p63
    %p65 = scmp.ne.s32.totalorder %s57, %s59
    %p66 = scmp.eq.s32.totalorder %s28, 1
    %p67 = por %p65, %p66
    %p68 = scmp.ne.s32.totalorder %s59, %s60
    %p69 = scmp.eq.s32.totalorder %s28, 0
    %p70 = por %p68, %p69
    %p71 = scmp.ne.s32.totalorder %s59, %s60
    %p72 = scmp.eq.s32.totalorder %s29, 1
    %p73 = por %p71, %p72
    %p75 = scmp.ne.s32.totalorder %s60, %s74
    %p76 = scmp.eq.s32.totalorder %s29, 0
    %p77 = por %p75, %p76
    %s79 = sadd.s32 %s78, 1
    %p82 = scmp.eq.s32.totalorder %s23, 1
    %p83 = scmp.ne.s32.totalorder %s78, %s80
    %p84 = scmp.eq.s32.totalorder %s23, 0
    %p85 = por %p83, %p84
    %p86 = scmp.ne.s32.totalorder %s78, %s80
    %p87 = scmp.eq.s32.totalorder %s28, 1
    %p88 = por %p86, %p87
    %p89 = scmp.ne.s32.totalorder %s80, %s81
    %p90 = scmp.eq.s32.totalorder %s28, 0
    %p91 = por %p89, %p90
    %p92 = scmp.ne.s32.totalorder %s80, %s81
    %p93 = scmp.eq.s32.totalorder %s29, 1
    %p94 = por %p92, %p93
    %p96 = scmp.ne.s32.totalorder %s81, %s95
    %p97 = scmp.eq.s32.totalorder %s29, 0
    %p98 = por %p96, %p97
    %s100 = sadd.s32 %s99, 1
    %p103 = scmp.eq.s32.totalorder %s23, 1
    %p104 = scmp.ne.s32.totalorder %s99, %s101
    %p105 = scmp.eq.s32.totalorder %s23, 0
    %p106 = por %p104, %p105
    %p107 = scmp.ne.s32.totalorder %s99, %s101
    %p108 = scmp.eq.s32.totalorder %s28, 1
    %p109 = por %p107, %p108
    %p110 = scmp.ne.s32.totalorder %s101, %s102
    %p111 = scmp.eq.s32.totalorder %s28, 0
    %p112 = por %p110, %p111
    %p113 = scmp.ne.s32.totalorder %s101, %s102
    %p114 = scmp.eq.s32.totalorder %s29, 1
    %p115 = por %p113, %p114
    %p117 = scmp.ne.s32.totalorder %s102, %s116
    %p118 = scmp.eq.s32.totalorder %s29, 0
    %p119 = por %p117, %p118
    %s121 = sadd.s32 %s120, 1
    %p124 = scmp.eq.s32.totalorder %s23, 1
    %p125 = scmp.ne.s32.totalorder %s120, %s122
    %p126 = scmp.eq.s32.totalorder %s23, 0
    %p127 = por %p125, %p126
    %p128 = scmp.ne.s32.totalorder %s120, %s122
    %p129 = scmp.eq.s32.totalorder %s28, 1
    %p130 = por %p128, %p129
    %p131 = scmp.ne.s32.totalorder %s122, %s123
    %p132 = scmp.eq.s32.totalorder %s28, 0
    %p133 = por %p131, %p132
    %p134 = scmp.ne.s32.totalorder %s122, %s123
    %p135 = scmp.eq.s32.totalorder %s29, 1
    %p136 = por %p134, %p135
    %p138 = scmp.ne.s32.totalorder %s123, %s137
    %p139 = scmp.eq.s32.totalorder %s29, 0
    %p140 = por %p138, %p139
    %s142 = sadd.s32 %s141, 1
    %p145 = scmp.eq.s32.totalorder %s23, 1
    %p146 = scmp.ne.s32.totalorder %s141, %s143
    %p147 = scmp.eq.s32.totalorder %s23, 0
    %p148 = por %p146, %p147
    %p149 = scmp.ne.s32.totalorder %s141, %s143
    %p150 = scmp.eq.s32.totalorder %s28, 1
    %p151 = por %p149, %p150
    %p152 = scmp.ne.s32.totalorder %s143, %s144
    %p153 = scmp.eq.s32.totalorder %s28, 0
    %p154 = por %p152, %p153
    %p155 = scmp.ne.s32.totalorder %s143, %s144
    %p156 = scmp.eq.s32.totalorder %s29, 1
    %p157 = por %p155, %p156
    %p159 = scmp.ne.s32.totalorder %s144, %s158
    %p160 = scmp.eq.s32.totalorder %s29, 0
    %p161 = por %p159, %p160
    %s163 = sadd.s32 %s162, 1
    %p166 = scmp.eq.s32.totalorder %s23, 1
    %p167 = scmp.ne.s32.totalorder %s162, %s164
    %p168 = scmp.eq.s32.totalorder %s23, 0
    %p169 = por %p167, %p168
    %p170 = scmp.ne.s32.totalorder %s162, %s164
    %p171 = scmp.eq.s32.totalorder %s28, 1
    %p172 = por %p170, %p171
    %p173 = scmp.ne.s32.totalorder %s164, %s165
    %p174 = scmp.eq.s32.totalorder %s28, 0
    %p175 = por %p173, %p174
    %p176 = scmp.ne.s32.totalorder %s164, %s165
    %p177 = scmp.eq.s32.totalorder %s29, 1
    %p178 = por %p176, %p177
    %p180 = scmp.ne.s32.totalorder %s165, %s179
    %p181 = scmp.eq.s32.totalorder %s29, 0
    %p182 = por %p180, %p181
    %s184 = sadd.s32 %s183, 1
    %p187 = scmp.eq.s32.totalorder %s23, 1
    %p188 = scmp.ne.s32.totalorder %s183, %s185
    %p189 = scmp.eq.s32.totalorder %s23, 0
    %p190 = por %p188, %p189
    %p191 = scmp.ne.s32.totalorder %s183, %s185
    %p192 = scmp.eq.s32.totalorder %s28, 1
    %p193 = por %p191, %p192
    %p194 = scmp.ne.s32.totalorder %s185, %s186
    %p195 = scmp.eq.s32.totalorder %s28, 0
    %p196 = por %p194, %p195
    %p197 = scmp.ne.s32.totalorder %s185, %s186
    %p198 = scmp.eq.s32.totalorder %s29, 1
    %p199 = por %p197, %p198
    %p201 = scmp.ne.s32.totalorder %s186, %s200
    %p202 = scmp.eq.s32.totalorder %s29, 0
    %p203 = por %p201, %p202
    %s205 = sadd.s32 %s204, 1
    %p208 = scmp.eq.s32.totalorder %s23, 1
    %p209 = scmp.ne.s32.totalorder %s204, %s206
    %p210 = scmp.eq.s32.totalorder %s23, 0
    %p211 = por %p209, %p210
    %p212 = scmp.ne.s32.totalorder %s204, %s206
    %p213 = scmp.eq.s32.totalorder %s28, 1
    %p214 = por %p212, %p213
    %p215 = scmp.ne.s32.totalorder %s206, %s207
    %p216 = scmp.eq.s32.totalorder %s28, 0
    %p217 = por %p215, %p216
    %p218 = scmp.ne.s32.totalorder %s206, %s207
    %p219 = scmp.eq.s32.totalorder %s29, 1
    %p220 = por %p218, %p219
    %p222 = scmp.ne.s32.totalorder %s207, %s221
    %p223 = scmp.eq.s32.totalorder %s29, 0
    %p224 = por %p222, %p223
    %s226 = sadd.s32 %s225, 1
    %p229 = scmp.eq.s32.totalorder %s23, 1
    %p230 = scmp.ne.s32.totalorder %s225, %s227
    %p231 = scmp.eq.s32.totalorder %s23, 0
    %p232 = por %p230, %p231
    %p233 = scmp.ne.s32.totalorder %s225, %s227
    %p234 = scmp.eq.s32.totalorder %s28, 1
    %p235 = por %p233, %p234
    %p236 = scmp.ne.s32.totalorder %s227, %s228
    %p237 = scmp.eq.s32.totalorder %s28, 0
    %p238 = por %p236, %p237
    %p239 = scmp.ne.s32.totalorder %s227, %s228
    %p240 = scmp.eq.s32.totalorder %s29, 1
    %p241 = por %p239, %p240
    %p243 = scmp.ne.s32.totalorder %s228, %s242
    %p244 = scmp.eq.s32.totalorder %s29, 0
    %p245 = por %p243, %p244
    %s247 = sadd.s32 %s246, 1
    %p250 = scmp.eq.s32.totalorder %s23, 1
    %p251 = scmp.ne.s32.totalorder %s246, %s248
    %p252 = scmp.eq.s32.totalorder %s23, 0
    %p253 = por %p251, %p252
    %p254 = scmp.ne.s32.totalorder %s246, %s248
    %p255 = scmp.eq.s32.totalorder %s28, 1
    %p256 = por %p254, %p255
    %p257 = scmp.ne.s32.totalorder %s248, %s249
    %p258 = scmp.eq.s32.totalorder %s28, 0
    %p259 = por %p257, %p258
    %p260 = scmp.ne.s32.totalorder %s248, %s249
    %p261 = scmp.eq.s32.totalorder %s29, 1
    %p262 = por %p260, %p261
    %p264 = scmp.ne.s32.totalorder %s249, %s263
    %p265 = scmp.eq.s32.totalorder %s29, 0
    %p266 = por %p264, %p265
    %s268 = sadd.s32 %s267, 1
    %p271 = scmp.eq.s32.totalorder %s23, 1
    %p272 = scmp.ne.s32.totalorder %s267, %s269
    %p273 = scmp.eq.s32.totalorder %s23, 0
    %p274 = por %p272, %p273
    %p275 = scmp.ne.s32.totalorder %s267, %s269
    %p276 = scmp.eq.s32.totalorder %s28, 1
    %p277 = por %p275, %p276
    %p278 = scmp.ne.s32.totalorder %s269, %s270
    %p279 = scmp.eq.s32.totalorder %s28, 0
    %p280 = por %p278, %p279
    %p281 = scmp.ne.s32.totalorder %s269, %s270
    %p282 = scmp.eq.s32.totalorder %s29, 1
    %p283 = por %p281, %p282
    %p285 = scmp.ne.s32.totalorder %s270, %s284
    %p286 = scmp.eq.s32.totalorder %s29, 0
    %p287 = por %p285, %p286
    %s289 = sadd.s32 %s288, 1
    %p292 = scmp.eq.s32.totalorder %s23, 1
    %p293 = scmp.ne.s32.totalorder %s288, %s290
    %p294 = scmp.eq.s32.totalorder %s23, 0
    %p295 = por %p293, %p294
    %p296 = scmp.ne.s32.totalorder %s288, %s290
    %p297 = scmp.eq.s32.totalorder %s28, 1
    %p298 = por %p296, %p297
    %p299 = scmp.ne.s32.totalorder %s290, %s291
    %p300 = scmp.eq.s32.totalorder %s28, 0
    %p301 = por %p299, %p300
    %p302 = scmp.ne.s32.totalorder %s290, %s291
    %p303 = scmp.eq.s32.totalorder %s29, 1
    %p304 = por %p302, %p303
    %p306 = scmp.ne.s32.totalorder %s291, %s305
    %p307 = scmp.eq.s32.totalorder %s29, 0
    %p308 = por %p306, %p307
    %s310 = sadd.s32 %s309, 1
    %p313 = scmp.eq.s32.totalorder %s23, 1
    %p314 = scmp.ne.s32.totalorder %s309, %s311
    %p315 = scmp.eq.s32.totalorder %s23, 0
    %p316 = por %p314, %p315
    %p317 = scmp.ne.s32.totalorder %s309, %s311
    %p318 = scmp.eq.s32.totalorder %s28, 1
    %p319 = por %p317, %p318
    %p320 = scmp.ne.s32.totalorder %s311, %s312
    %p321 = scmp.eq.s32.totalorder %s28, 0
    %p322 = por %p320, %p321
    %p323 = scmp.ne.s32.totalorder %s311, %s312
    %p324 = scmp.eq.s32.totalorder %s29, 1
    %p325 = por %p323, %p324
    %p327 = scmp.ne.s32.totalorder %s312, %s326
    %p328 = scmp.eq.s32.totalorder %s29, 0
    %p329 = por %p327, %p328
    %s331 = sadd.s32 %s330, 1
    %p334 = scmp.eq.s32.totalorder %s23, 1
    %p335 = scmp.ne.s32.totalorder %s330, %s332
    %p336 = scmp.eq.s32.totalorder %s23, 0
    %p337 = por %p335, %p336
    %p338 = scmp.ne.s32.totalorder %s330, %s332
    %p339 = scmp.eq.s32.totalorder %s28, 1
    %p340 = por %p338, %p339
    %p341 = scmp.ne.s32.totalorder %s332, %s333
    %p342 = scmp.eq.s32.totalorder %s28, 0
    %p343 = por %p341, %p342
    %p344 = scmp.ne.s32.totalorder %s332, %s333
    %p345 = scmp.eq.s32.totalorder %s29, 1
    %p346 = por %p344, %p345
    %p348 = scmp.ne.s32.totalorder %s333, %s347
    %p349 = scmp.eq.s32.totalorder %s29, 0
    %p350 = por %p348, %p349
    %s352 = sadd.s32 %s351, 1
    %p355 = scmp.eq.s32.totalorder %s23, 1
    %p356 = scmp.ne.s32.totalorder %s351, %s353
    %p357 = scmp.eq.s32.totalorder %s23, 0
    %p358 = por %p356, %p357
    %p359 = scmp.ne.s32.totalorder %s351, %s353
    %p360 = scmp.eq.s32.totalorder %s28, 1
    %p361 = por %p359, %p360
    %p362 = scmp.ne.s32.totalorder %s353, %s354
    %p363 = scmp.eq.s32.totalorder %s28, 0
    %p364 = por %p362, %p363
    %p365 = scmp.ne.s32.totalorder %s353, %s354
    %p366 = scmp.eq.s32.totalorder %s29, 1
    %p367 = por %p365, %p366
    %p369 = scmp.ne.s32.totalorder %s354, %s368
    %p370 = scmp.eq.s32.totalorder %s29, 0
    %p371 = por %p369, %p370
    %s373 = sadd.s32 %s372, 1
    %p376 = scmp.eq.s32.totalorder %s23, 1
    %p377 = scmp.ne.s32.totalorder %s372, %s374
    %p378 = scmp.eq.s32.totalorder %s23, 0
    %p379 = por %p377, %p378
    %p380 = scmp.ne.s32.totalorder %s372, %s374
    %p381 = scmp.eq.s32.totalorder %s28, 1
    %p382 = por %p380, %p381
    %p383 = scmp.ne.s32.totalorder %s374, %s375
    %p384 = scmp.eq.s32.totalorder %s28, 0
    %p385 = por %p383, %p384
    %p386 = scmp.ne.s32.totalorder %s374, %s375
    %p387 = scmp.eq.s32.totalorder %s29, 1
    %p388 = por %p386, %p387
    %p390 = scmp.ne.s32.totalorder %s375, %s389
    %p391 = scmp.eq.s32.totalorder %s29, 0
    %p392 = por %p390, %p391
    %s393 = ssub.s32 %s23, %s30
    %p394 = scmp.eq.s32.totalorder %s393, 0
    %s396 = sadd.s32 %s395, 1
    %s397 = scalar_select %p394, %s395, %s396
    %p400 = pneg %p394
    %p401 = scmp.eq.s32.totalorder %s23, 1
    %p402 = por %p400, %p401
    %p403 = scmp.ne.s32.totalorder %s395, %s398
    %p404 = scmp.eq.s32.totalorder %s23, 0
    %p405 = por %p403, %p404
    %p406 = scmp.ne.s32.totalorder %s395, %s398
    %p407 = scmp.eq.s32.totalorder %s28, 1
    %p408 = por %p406, %p407
    %p409 = scmp.ne.s32.totalorder %s398, %s399
    %p410 = scmp.eq.s32.totalorder %s28, 0
    %p411 = por %p409, %p410
    %p412 = scmp.ne.s32.totalorder %s398, %s399
    %p413 = scmp.eq.s32.totalorder %s29, 1
    %p414 = por %p412, %p413
    %p416 = scmp.ne.s32.totalorder %s399, %s415
    %p417 = scmp.eq.s32.totalorder %s29, 0
    %p418 = por %p416, %p417
    %p419 = scmp.le.s32.totalorder 1, %s23
    %p420 = scmp.lt.s32.totalorder %s23, 3
    %p421 = pnand %p419, %p420
    %p422 = pneg %p421
    // Predicated region
    $region9: #{up_forward.1} parent=5 // pred_check
      _
    $region10: #{up_forward.1} parent=5 // pred_check_branch
      %424 = sbr.rel (%p421) target = $region12
    $region11: #{up_forward.1} parent=5 // pred_region
      %s425 = ssub.s32 %s23, 1
      // Predicated region
      $region13: #{up_forward.1} parent=11 // pred_check
        %p426 = pneg %p70
      $region14: #{up_forward.1} parent=11 // pred_check_branch
        %428 = sbr.rel (%p426) target = $region16
      $region15: #{up_forward.1} parent=11 // pred_region
        _
      $region16: #{up_forward.1} parent=11 // pred_fallthru
        _
      // Predicated region
      $region17: #{up_forward.1} parent=11 // pred_check
        %p429 = pneg %p91
      $region18: #{up_forward.1} parent=11 // pred_check_branch
        %431 = sbr.rel (%p429) target = $region20
      $region19: #{up_forward.1} parent=11 // pred_region
        _
      $region20: #{up_forward.1} parent=11 // pred_fallthru
        _
      // Predicated region
      $region21: #{up_forward.1} parent=11 // pred_check
        %p432 = pneg %p112
      $region22: #{up_forward.1} parent=11 // pred_check_branch
        %434 = sbr.rel (%p432) target = $region24
      $region23: #{up_forward.1} parent=11 // pred_region
        _
      $region24: #{up_forward.1} parent=11 // pred_fallthru
        _
      // Predicated region
      $region25: #{up_forward.1} parent=11 // pred_check
        %p435 = pneg %p133
      $region26: #{up_forward.1} parent=11 // pred_check_branch
        %437 = sbr.rel (%p435) target = $region28
      $region27: #{up_forward.1} parent=11 // pred_region
        _
      $region28: #{up_forward.1} parent=11 // pred_fallthru
        _
      // Predicated region
      $region29: #{up_forward.1} parent=11 // pred_check
        %p438 = pneg %p154
      $region30: #{up_forward.1} parent=11 // pred_check_branch
        %440 = sbr.rel (%p438) target = $region32
      $region31: #{up_forward.1} parent=11 // pred_region
        _
      $region32: #{up_forward.1} parent=11 // pred_fallthru
        _
      // Predicated region
      $region33: #{up_forward.1} parent=11 // pred_check
        %p441 = pneg %p175
      $region34: #{up_forward.1} parent=11 // pred_check_branch
        %443 = sbr.rel (%p441) target = $region36
      $region35: #{up_forward.1} parent=11 // pred_region
        _
      $region36: #{up_forward.1} parent=11 // pred_fallthru
        _
      // Predicated region
      $region37: #{up_forward.1} parent=11 // pred_check
        %p444 = pneg %p196
      $region38: #{up_forward.1} parent=11 // pred_check_branch
        %446 = sbr.rel (%p444) target = $region40
      $region39: #{up_forward.1} parent=11 // pred_region
        _
      $region40: #{up_forward.1} parent=11 // pred_fallthru
        _
      // Predicated region
      $region41: #{up_forward.1} parent=11 // pred_check
        %p447 = pneg %p217
      $region42: #{up_forward.1} parent=11 // pred_check_branch
        %449 = sbr.rel (%p447) target = $region44
      $region43: #{up_forward.1} parent=11 // pred_region
        _
      $region44: #{up_forward.1} parent=11 // pred_fallthru
        _
      // Predicated region
      $region45: #{up_forward.1} parent=11 // pred_check
        %p450 = pneg %p238
      $region46: #{up_forward.1} parent=11 // pred_check_branch
        %452 = sbr.rel (%p450) target = $region48
      $region47: #{up_forward.1} parent=11 // pred_region
        _
      $region48: #{up_forward.1} parent=11 // pred_fallthru
        _
      // Predicated region
      $region49: #{up_forward.1} parent=11 // pred_check
        %p453 = pneg %p259
      $region50: #{up_forward.1} parent=11 // pred_check_branch
        %455 = sbr.rel (%p453) target = $region52
      $region51: #{up_forward.1} parent=11 // pred_region
        _
      $region52: #{up_forward.1} parent=11 // pred_fallthru
        _
      // Predicated region
      $region53: #{up_forward.1} parent=11 // pred_check
        %p456 = pneg %p280
      $region54: #{up_forward.1} parent=11 // pred_check_branch
        %458 = sbr.rel (%p456) target = $region56
      $region55: #{up_forward.1} parent=11 // pred_region
        _
      $region56: #{up_forward.1} parent=11 // pred_fallthru
        _
      // Predicated region
      $region57: #{up_forward.1} parent=11 // pred_check
        %p459 = pneg %p301
      $region58: #{up_forward.1} parent=11 // pred_check_branch
        %461 = sbr.rel (%p459) target = $region60
      $region59: #{up_forward.1} parent=11 // pred_region
        _
      $region60: #{up_forward.1} parent=11 // pred_fallthru
        _
      // Predicated region
      $region61: #{up_forward.1} parent=11 // pred_check
        %p462 = pneg %p322
      $region62: #{up_forward.1} parent=11 // pred_check_branch
        %464 = sbr.rel (%p462) target = $region64
      $region63: #{up_forward.1} parent=11 // pred_region
        _
      $region64: #{up_forward.1} parent=11 // pred_fallthru
        _
      // Predicated region
      $region65: #{up_forward.1} parent=11 // pred_check
        %p465 = pneg %p343
      $region66: #{up_forward.1} parent=11 // pred_check_branch
        %467 = sbr.rel (%p465) target = $region68
      $region67: #{up_forward.1} parent=11 // pred_region
        _
      $region68: #{up_forward.1} parent=11 // pred_fallthru
        _
      // Predicated region
      $region69: #{up_forward.1} parent=11 // pred_check
        %p468 = pneg %p364
      $region70: #{up_forward.1} parent=11 // pred_check_branch
        %470 = sbr.rel (%p468) target = $region72
      $region71: #{up_forward.1} parent=11 // pred_region
        _
      $region72: #{up_forward.1} parent=11 // pred_fallthru
        _
      // Predicated region
      $region73: #{up_forward.1} parent=11 // pred_check
        %p471 = pneg %p385
      $region74: #{up_forward.1} parent=11 // pred_check_branch
        %473 = sbr.rel (%p471) target = $region76
      $region75: #{up_forward.1} parent=11 // pred_region
        _
      $region76: #{up_forward.1} parent=11 // pred_fallthru
        _
    $region12: #{up_forward.1} parent=5 // pred_fallthru
      _
    %p474 = scmp.lt.s32.totalorder %s23, 2
    // Predicated region
    $region77: #{up_forward.1} parent=5 // pred_check
      %p475 = pneg %p474
    $region78: #{up_forward.1} parent=5 // pred_check_branch
      %477 = sbr.rel (%p475) target = $region80
    $region79: #{up_forward.1} parent=5 // pred_region
      // Predicated region
      $region81: #{up_forward.1} parent=79 // pred_check
        %p478 = pneg %p43
      $region82: #{up_forward.1} parent=79 // pred_check_branch
        %480 = sbr.rel (%p478) target = $region84
      $region83: #{up_forward.1} parent=79 // pred_region
        %p481 = scmp.lt.s32.totalorder %s23, 1
        %s482 = scalar_select %p481, %s23, 1
        %s483 = smul.addr %s482, 4
        %s484 = smul.addr %s483, 8
        %s485 = scalar_lea.vmem %s0, %s484
      $region84: #{up_forward.1} parent=79 // pred_fallthru
        _
    $region80: #{up_forward.1} parent=5 // pred_fallthru
      _
    %p486 = scmp.le.s32.totalorder 1, %s23
    %p487 = scmp.lt.s32.totalorder %s23, 3
    %p488 = pnand %p486, %p487
    %p489 = pneg %p488
    // Predicated region
    $region85: #{up_forward.1} parent=5 // pred_check
      _
    $region86: #{up_forward.1} parent=5 // pred_check_branch
      %491 = sbr.rel (%p488) target = $region88
    $region87: #{up_forward.1} parent=5 // pred_region
      %s492 = ssub.s32 %s23, 1
      %p493 = scmp.lt.s32.totalorder %s28, 1
      %s494 = scalar_select %p493, %s28, 1
      %s495 = smul.addr %s494, 4
      %s496 = smul.addr %s495, 8
      %s497 = scalar_lea.vmem %s0, %s496
      %p498 = pneg %p49
      %p499 = pneg %p46
      %p500 = pneg %p70
      %p501 = pneg %p67
      %p502 = pneg %p91
      %p503 = pneg %p88
      %p504 = pneg %p112
      %p505 = pneg %p109
      %p506 = pneg %p133
      %p507 = pneg %p130
      %p508 = pneg %p154
      %p509 = pneg %p151
      %p510 = pneg %p175
      %p511 = pneg %p172
      %p512 = pneg %p196
      %p513 = pneg %p193
      %p514 = pneg %p217
      %p515 = pneg %p214
      %p516 = pneg %p238
      %p517 = pneg %p235
      %p518 = pneg %p259
      %p519 = pneg %p256
      %p520 = pneg %p280
      %p521 = pneg %p277
      %p522 = pneg %p301
      %p523 = pneg %p298
      %p524 = pneg %p322
      %p525 = pneg %p319
      %p526 = pneg %p343
      %p527 = pneg %p340
      %p528 = pneg %p364
      %p529 = pneg %p361
      %p530 = pneg %p385
      %p531 = pneg %p382
      %p532 = pneg %p411
      %p533 = pneg %p408
      %p534 = scmp.lt.s32.totalorder %s28, 1
      %s535 = scalar_select %p534, %s28, 1
      %s536 = smul.addr %s535, 2
      %s537 = smul.addr %s536, 8
      %s538 = scalar_lea.vmem %s17, %s537
      %p539 = scmp.lt.s32.totalorder %s28, 1
      %s540 = scalar_select %p539, %s28, 1
      %s541 = smul.addr %s540, 4
      %s542 = smul.addr %s541, 8
      %s543 = scalar_lea.vmem %s0, %s542
      %p544 = scmp.lt.s32.totalorder %s28, 1
      %s545 = scalar_select %p544, %s28, 1
      %s546 = smul.addr %s545, 2
      %s547 = smul.addr %s546, 8
      %s548 = scalar_lea.vmem %s17, %s547
      %v549 = vld [vmem:[%s543] sm:$0xff]
      %v550 = vld [vmem:[%s543 + $0x8] sm:$0xff]
      %v551 = vld [vmem:[%s543 + $0x10] sm:$0xff]
      %v552 = vld [vmem:[%s543 + $0x18] sm:$0xff]
      %557 = vrot.lane.b32.xlu0 %v549, 127
      %v558 = vpop.permute.xlu0 %557
      %559 = vrot.lane.b32.xlu0 %v550, 127
      %v560 = vpop.permute.xlu0 %559
      %561 = vrot.lane.b32.xlu0 %v551, 127
      %v562 = vpop.permute.xlu0 %561
      %563 = vrot.lane.b32.xlu0 %v552, 127
      %v564 = vpop.permute.xlu0 %563
      %vm565 = vcmask 1039360
      %v566 = vsel %vm565, %v558, %v560
      %v567 = vsel %vm565, %v562, %v564
      %572 = vrot.lane.b32.xlu0 %v549, 114
      %v573 = vpop.permute.xlu0 %572
      %574 = vrot.lane.b32.xlu0 %v550, 114
      %v575 = vpop.permute.xlu0 %574
      %576 = vrot.lane.b32.xlu0 %v551, 114
      %v577 = vpop.permute.xlu0 %576
      %578 = vrot.lane.b32.xlu0 %v552, 114
      %v579 = vpop.permute.xlu0 %578
      %vm580 = vcmask 932864
      %v581 = vsel %vm580, %v573, %v575
      %v582 = vsel %vm580, %v577, %v579
      %587 = vrot.lane.b32.xlu0 %v549, 113
      %v588 = vpop.permute.xlu0 %587
      %589 = vrot.lane.b32.xlu0 %v550, 113
      %v590 = vpop.permute.xlu0 %589
      %591 = vrot.lane.b32.xlu0 %v551, 113
      %v592 = vpop.permute.xlu0 %591
      %593 = vrot.lane.b32.xlu0 %v552, 113
      %v594 = vpop.permute.xlu0 %593
      %vm595 = vcmask 924672
      %v596 = vsel %vm595, %v588, %v590
      %v597 = vsel %vm595, %v592, %v594
      %v602 = vld [vmem:[%s1] sm:$0xff]
      %v603 = vld [vmem:[%s1 + $0x8] sm:$0xff]
      %v604 = vld [vmem:[%s2] sm:$0xff]
      %v605 = vld [vmem:[%s2 + $0x8] sm:$0xff]
      %v606 = vld [vmem:[%s2 + $0x10] sm:$0xff]
      %v607 = vld [vmem:[%s2 + $0x18] sm:$0xff]
      %vm608 = vcmask 523264
      %v610 = vsel %vm608, %v602, 0
      %v613 = vsel %vm608, %v603, 0
      %615 = vmatpush.msra.mxu0 0.0
      %616 = vmatpush.msra.mxu0 0.0
      %617 = vmatpush.msra.mxu0 0.0
      %618 = vmatpush.msra.mxu0 0.0
      %619 = vmatpush.msra.mxu0 0.0
      %620 = vmatpush.msra.mxu0 0.0
      %621 = vmatpush.msra.mxu0 0.0
      %622 = vmatpush.msra.mxu0 0.0
      %623 = vmatpush.msra.mxu0 %v597
      %624 = vmatpush.msra.mxu0 %v596
      %625 = vmatpush.msra.mxu0 %v582
      %626 = vmatpush.msra.mxu0 %v581
      %627 = vmatpush.msra.mxu0 %v567
      %628 = vmatpush.msra.mxu0 %v566
      %629 = vmatpush.msra.mxu0 %v551
      %630 = vmatpush.msra.mxu0 %v549
      %631 = vmatmul.f32.gmra.mxu0 %v610
      %v632 = vpop.f32.mrf.mxu0
      %v633 = vadd.f32 %v604, %v632
      %634 = vmatmul.f32.gmra.mxu0 %v613
      %v635 = vpop.f32.mrf.mxu0
      %v636 = vadd.f32 %v606, %v635
      %637 = vdwg.mxu0
      %638 = vmatpush.msra.mxu0 0.0
      %639 = vmatpush.msra.mxu0 0.0
      %640 = vmatpush.msra.mxu0 0.0
      %641 = vmatpush.msra.mxu0 0.0
      %642 = vmatpush.msra.mxu0 0.0
      %643 = vmatpush.msra.mxu0 0.0
      %644 = vmatpush.msra.mxu0 0.0
      %645 = vmatpush.msra.mxu0 0.0
      %646 = vmatpush.msra.mxu0 %v594
      %647 = vmatpush.msra.mxu0 %v590
      %648 = vmatpush.msra.mxu0 %v579
      %649 = vmatpush.msra.mxu0 %v575
      %650 = vmatpush.msra.mxu0 %v564
      %651 = vmatpush.msra.mxu0 %v560
      %652 = vmatpush.msra.mxu0 %v552
      %653 = vmatpush.msra.mxu0 %v550
      %654 = vmatmul.f32.gmra.mxu0 %v610
      %v655 = vpop.f32.mrf.mxu0
      %v656 = vadd.f32 %v605, %v655
      %657 = vmatmul.f32.gmra.mxu0 %v613
      %v658 = vpop.f32.mrf.mxu0
      %v659 = vadd.f32 %v607, %v658
      %660 = vdwg.mxu0
      %v661 = vmax.f32 %v633, 0.0
      %v662 = vmax.f32 %v656, 0.0
      %v663 = vmax.f32 %v636, 0.0
      %v664 = vmax.f32 %v659, 0.0
      %v665 = vld [vmem:[%s3] sm:$0x3]
      %v667 = vperm.slane %v665, 0
      %v668 = vperm.slane %v665, 1
      %v671 = vmul.f32 %v661, %v667
      %v672 = vmul.f32 %v662, %v668
      %v673 = vmul.f32 %v663, %v667
      %v674 = vmul.f32 %v664, %v668
      %v675 = vld [vmem:[%s4] sm:$0xff]
      %v676 = vld [vmem:[%s4 + $0x8] sm:$0xff]
      %v677 = vld [vmem:[%s5] sm:$0xff]
      %v678 = vld [vmem:[%s5 + $0x8] sm:$0xff]
      %680 = vset.pattern.permute.xlu0 0
      %681 = vperm.xlu0 %680, %v677
      %v682 = vpop.permute.xlu0 %681
      %685 = vset.pattern.permute.xlu0 0
      %686 = vperm.xlu0 %685, %v678
      %v687 = vpop.permute.xlu0 %686
      %693 = vrot.lane.b32.xlu0 %v671, 83
      %v694 = vpop.permute.xlu0 %693
      %695 = vrot.lane.b32.xlu0 %v672, 83
      %v696 = vpop.permute.xlu0 %695
      %697 = vrot.lane.b32.xlu0 %v673, 83
      %v698 = vpop.permute.xlu0 %697
      %699 = vrot.lane.b32.xlu0 %v674, 83
      %v700 = vpop.permute.xlu0 %699
      %vm701 = vcmask 678912
      %v702 = vsel %vm701, %v694, %v696
      %v703 = vsel %vm701, %v698, %v700
      %vm706 = vcmask 130048
      %v708 = vsel %vm706, %v675, 0
      %v711 = vsel %vm706, %v676, 0
      %713 = vmatpush.msra.mxu0 0.0
      %714 = vmatpush.msra.mxu0 0.0
      %715 = vmatpush.msra.mxu0 0.0
      %716 = vmatpush.msra.mxu0 0.0
      %717 = vmatpush.msra.mxu0 0.0
      %718 = vmatpush.msra.mxu0 0.0
      %719 = vmatpush.msra.mxu0 0.0
      %720 = vmatpush.msra.mxu0 0.0
      %721 = vmatpush.msra.mxu0 0.0
      %722 = vmatpush.msra.mxu0 0.0
      %723 = vmatpush.msra.mxu0 0.0
      %724 = vmatpush.msra.mxu0 0.0
      %725 = vmatpush.msra.mxu0 0.0
      %726 = vmatpush.msra.mxu0 0.0
      %727 = vmatpush.msra.mxu0 %v703
      %728 = vmatpush.msra.mxu0 %v702
      %729 = vmatmul.f32.gmra.mxu0 %v708
      %v730 = vpop.f32.mrf.mxu0
      %v731 = vadd.f32 %v682, %v730
      %732 = vmatmul.f32.gmra.mxu0 %v711
      %v733 = vpop.f32.mrf.mxu0
      %v734 = vadd.f32 %v687, %v733
      %735 = vdwg.mxu0
      %v736 = vmax.f32 %v731, 0.0
      %v737 = vmax.f32 %v734, 0.0
      %740 = vrot.lane.b32.xlu0 %v736, 45
      %v741 = vpop.permute.xlu0 %740
      %742 = vrot.lane.b32.xlu0 %v737, 45
      %v743 = vpop.permute.xlu0 %742
      %v746 = vadd.f32 %v671, %v741
      %v747 = vadd.f32 %v672, %v741
      %v748 = vadd.f32 %v673, %v743
      %v749 = vadd.f32 %v674, %v743
      %750 = vrot.lane.b32.xlu0 %v671, 127
      %v751 = vpop.permute.xlu0 %750
      %752 = vrot.lane.b32.xlu0 %v672, 127
      %v753 = vpop.permute.xlu0 %752
      %754 = vrot.lane.b32.xlu0 %v673, 127
      %v755 = vpop.permute.xlu0 %754
      %756 = vrot.lane.b32.xlu0 %v674, 127
      %v757 = vpop.permute.xlu0 %756
      %v758 = vsel %vm565, %v751, %v753
      %v759 = vsel %vm565, %v755, %v757
      %760 = vrot.lane.b32.xlu0 %v671, 126
      %v761 = vpop.permute.xlu0 %760
      %762 = vrot.lane.b32.xlu0 %v672, 126
      %v763 = vpop.permute.xlu0 %762
      %764 = vrot.lane.b32.xlu0 %v673, 126
      %v765 = vpop.permute.xlu0 %764
      %766 = vrot.lane.b32.xlu0 %v674, 126
      %v767 = vpop.permute.xlu0 %766
      %vm768 = vcmask 1031168
      %v769 = vsel %vm768, %v761, %v763
      %v770 = vsel %vm768, %v765, %v767
      %771 = vrot.lane.b32.xlu0 %v671, 114
      %v772 = vpop.permute.xlu0 %771
      %773 = vrot.lane.b32.xlu0 %v672, 114
      %v774 = vpop.permute.xlu0 %773
      %775 = vrot.lane.b32.xlu0 %v673, 114
      %v776 = vpop.permute.xlu0 %775
      %777 = vrot.lane.b32.xlu0 %v674, 114
      %v778 = vpop.permute.xlu0 %777
      %v779 = vsel %vm580, %v772, %v774
      %v780 = vsel %vm580, %v776, %v778
      %781 = vrot.lane.b32.xlu0 %v671, 113
      %v782 = vpop.permute.xlu0 %781
      %783 = vrot.lane.b32.xlu0 %v672, 113
      %v784 = vpop.permute.xlu0 %783
      %785 = vrot.lane.b32.xlu0 %v673, 113
      %v786 = vpop.permute.xlu0 %785
      %787 = vrot.lane.b32.xlu0 %v674, 113
      %v788 = vpop.permute.xlu0 %787
      %v789 = vsel %vm595, %v782, %v784
      %v790 = vsel %vm595, %v786, %v788
      %791 = vrot.lane.b32.xlu0 %v671, 112
      %v792 = vpop.permute.xlu0 %791
      %793 = vrot.lane.b32.xlu0 %v672, 112
      %v794 = vpop.permute.xlu0 %793
      %795 = vrot.lane.b32.xlu0 %v673, 112
      %v796 = vpop.permute.xlu0 %795
      %797 = vrot.lane.b32.xlu0 %v674, 112
      %v798 = vpop.permute.xlu0 %797
      %vm799 = vcmask 916480
      %v800 = vsel %vm799, %v792, %v794
      %v801 = vsel %vm799, %v796, %v798
      %802 = vrot.lane.b32.xlu0 %v671, 100
      %v803 = vpop.permute.xlu0 %802
      %804 = vrot.lane.b32.xlu0 %v672, 100
      %v805 = vpop.permute.xlu0 %804
      %806 = vrot.lane.b32.xlu0 %v673, 100
      %v807 = vpop.permute.xlu0 %806
      %808 = vrot.lane.b32.xlu0 %v674, 100
      %v809 = vpop.permute.xlu0 %808
      %vm810 = vcmask 818176
      %v811 = vsel %vm810, %v803, %v805
      %v812 = vsel %vm810, %v807, %v809
      %813 = vrot.lane.b32.xlu0 %v671, 99
      %v814 = vpop.permute.xlu0 %813
      %815 = vrot.lane.b32.xlu0 %v672, 99
      %v816 = vpop.permute.xlu0 %815
      %817 = vrot.lane.b32.xlu0 %v673, 99
      %v818 = vpop.permute.xlu0 %817
      %819 = vrot.lane.b32.xlu0 %v674, 99
      %v820 = vpop.permute.xlu0 %819
      %vm821 = vcmask 809984
      %v822 = vsel %vm821, %v814, %v816
      %v823 = vsel %vm821, %v818, %v820
      %824 = vrot.lane.b32.xlu0 %v671, 98
      %v825 = vpop.permute.xlu0 %824
      %826 = vrot.lane.b32.xlu0 %v672, 98
      %v827 = vpop.permute.xlu0 %826
      %828 = vrot.lane.b32.xlu0 %v673, 98
      %v829 = vpop.permute.xlu0 %828
      %830 = vrot.lane.b32.xlu0 %v674, 98
      %v831 = vpop.permute.xlu0 %830
      %vm832 = vcmask 801792
      %v833 = vsel %vm832, %v825, %v827
      %v834 = vsel %vm832, %v829, %v831
      %v835 = vld [vmem:[%s6] sm:$0xff]
      %v836 = vld [vmem:[%s6 + $0x8] sm:$0xff]
      %v837 = vld [vmem:[%s6 + $0x10] sm:$0xff]
      %v838 = vld [vmem:[%s6 + $0x18] sm:$0xff]
      %839 = vrot.lane.b32.xlu0 %v758, 113
      %v840 = vpop.permute.xlu0 %839
      %841 = vrot.lane.b32.xlu0 %v753, 113
      %v842 = vpop.permute.xlu0 %841
      %843 = vrot.lane.b32.xlu0 %v759, 113
      %v844 = vpop.permute.xlu0 %843
      %845 = vrot.lane.b32.xlu0 %v757, 113
      %v846 = vpop.permute.xlu0 %845
      %847 = vrot.lane.b32.xlu0 %v769, 113
      %v848 = vpop.permute.xlu0 %847
      %849 = vrot.lane.b32.xlu0 %v763, 113
      %v850 = vpop.permute.xlu0 %849
      %851 = vrot.lane.b32.xlu0 %v770, 113
      %v852 = vpop.permute.xlu0 %851
      %853 = vrot.lane.b32.xlu0 %v767, 113
      %v854 = vpop.permute.xlu0 %853
      %855 = vrot.lane.b32.xlu0 %v779, 113
      %v856 = vpop.permute.xlu0 %855
      %857 = vrot.lane.b32.xlu0 %v774, 113
      %v858 = vpop.permute.xlu0 %857
      %859 = vrot.lane.b32.xlu0 %v780, 113
      %v860 = vpop.permute.xlu0 %859
      %861 = vrot.lane.b32.xlu0 %v778, 113
      %v862 = vpop.permute.xlu0 %861
      %863 = vrot.lane.b32.xlu0 %v789, 113
      %v864 = vpop.permute.xlu0 %863
      %865 = vrot.lane.b32.xlu0 %v784, 113
      %v866 = vpop.permute.xlu0 %865
      %867 = vrot.lane.b32.xlu0 %v790, 113
      %v868 = vpop.permute.xlu0 %867
      %869 = vrot.lane.b32.xlu0 %v788, 113
      %v870 = vpop.permute.xlu0 %869
      %871 = vrot.lane.b32.xlu0 %v800, 113
      %v872 = vpop.permute.xlu0 %871
      %873 = vrot.lane.b32.xlu0 %v794, 113
      %v874 = vpop.permute.xlu0 %873
      %875 = vrot.lane.b32.xlu0 %v801, 113
      %v876 = vpop.permute.xlu0 %875
      %877 = vrot.lane.b32.xlu0 %v798, 113
      %v878 = vpop.permute.xlu0 %877
      %879 = vrot.lane.b32.xlu0 %v811, 113
      %v880 = vpop.permute.xlu0 %879
      %881 = vrot.lane.b32.xlu0 %v805, 113
      %v882 = vpop.permute.xlu0 %881
      %883 = vrot.lane.b32.xlu0 %v812, 113
      %v884 = vpop.permute.xlu0 %883
      %885 = vrot.lane.b32.xlu0 %v809, 113
      %v886 = vpop.permute.xlu0 %885
      %887 = vrot.lane.b32.xlu0 %v822, 113
      %v888 = vpop.permute.xlu0 %887
      %889 = vrot.lane.b32.xlu0 %v816, 113
      %v890 = vpop.permute.xlu0 %889
      %891 = vrot.lane.b32.xlu0 %v823, 113
      %v892 = vpop.permute.xlu0 %891
      %893 = vrot.lane.b32.xlu0 %v820, 113
      %v894 = vpop.permute.xlu0 %893
      %895 = vrot.lane.b32.xlu0 %v833, 113
      %v896 = vpop.permute.xlu0 %895
      %897 = vrot.lane.b32.xlu0 %v827, 113
      %v898 = vpop.permute.xlu0 %897
      %899 = vrot.lane.b32.xlu0 %v834, 113
      %v900 = vpop.permute.xlu0 %899
      %901 = vrot.lane.b32.xlu0 %v831, 113
      %v902 = vpop.permute.xlu0 %901
      %v903 = vsel %vm595, %v840, %v842
      %v904 = vsel %vm595, %v844, %v846
      %v905 = vsel %vm595, %v848, %v850
      %v906 = vsel %vm595, %v852, %v854
      %v907 = vsel %vm595, %v856, %v858
      %v908 = vsel %vm595, %v860, %v862
      %v909 = vsel %vm595, %v864, %v866
      %v910 = vsel %vm595, %v868, %v870
      %v911 = vsel %vm595, %v872, %v874
      %v912 = vsel %vm595, %v876, %v878
      %v913 = vsel %vm595, %v880, %v882
      %v914 = vsel %vm595, %v884, %v886
      %v915 = vsel %vm595, %v888, %v890
      %v916 = vsel %vm595, %v892, %v894
      %v917 = vsel %vm595, %v896, %v898
      %v918 = vsel %vm595, %v900, %v902
      %v956 = vsel %vm706, %v836, 0
      %v959 = vsel %vm706, %v838, 0
      %961 = vmatpush.msra.mxu0 %v916
      %962 = vmatpush.msra.mxu0 %v915
      %963 = vmatpush.msra.mxu0 %v914
      %964 = vmatpush.msra.mxu0 %v913
      %965 = vmatpush.msra.mxu0 %v912
      %966 = vmatpush.msra.mxu0 %v911
      %967 = vmatpush.msra.mxu0 %v910
      %968 = vmatpush.msra.mxu0 %v909
      %969 = vmatpush.msra.mxu0 %v908
      %970 = vmatpush.msra.mxu0 %v907
      %971 = vmatpush.msra.mxu0 %v906
      %972 = vmatpush.msra.mxu0 %v905
      %973 = vmatpush.msra.mxu0 %v904
      %974 = vmatpush.msra.mxu0 %v903
      %975 = vmatpush.msra.mxu0 %v790
      %976 = vmatpush.msra.mxu0 %v789
      %977 = vmatmul.f32.gmra.mxu0 %v835
      %v978 = vpop.f32.mrf.mxu0
      %v979 = vadd.f32 0.0, %v978
      %980 = vmatmul.f32.gmra.mxu0 %v837
      %v981 = vpop.f32.mrf.mxu0
      %v982 = vadd.f32 0.0, %v981
      %983 = vdwg.mxu0
      %984 = vmatpush.msra.mxu0 0.0
      %985 = vmatpush.msra.mxu0 0.0
      %986 = vmatpush.msra.mxu0 0.0
      %987 = vmatpush.msra.mxu0 0.0
      %988 = vmatpush.msra.mxu0 0.0
      %989 = vmatpush.msra.mxu0 0.0
      %990 = vmatpush.msra.mxu0 0.0
      %991 = vmatpush.msra.mxu0 0.0
      %992 = vmatpush.msra.mxu0 0.0
      %993 = vmatpush.msra.mxu0 0.0
      %994 = vmatpush.msra.mxu0 0.0
      %995 = vmatpush.msra.mxu0 0.0
      %996 = vmatpush.msra.mxu0 0.0
      %997 = vmatpush.msra.mxu0 0.0
      %998 = vmatpush.msra.mxu0 %v918
      %999 = vmatpush.msra.mxu0 %v917
      %1000 = vmatmul.f32.gmra.mxu0 %v956
      %v1001 = vpop.f32.mrf.mxu0
      %v1002 = vadd.f32 %v979, %v1001
      %1003 = vmatmul.f32.gmra.mxu0 %v959
      %v1004 = vpop.f32.mrf.mxu0
      %v1005 = vadd.f32 %v982, %v1004
      %1006 = vdwg.mxu0
      %1007 = vmatpush.msra.mxu0 %v894
      %1008 = vmatpush.msra.mxu0 %v890
      %1009 = vmatpush.msra.mxu0 %v886
      %1010 = vmatpush.msra.mxu0 %v882
      %1011 = vmatpush.msra.mxu0 %v878
      %1012 = vmatpush.msra.mxu0 %v874
      %1013 = vmatpush.msra.mxu0 %v870
      %1014 = vmatpush.msra.mxu0 %v866
      %1015 = vmatpush.msra.mxu0 %v862
      %1016 = vmatpush.msra.mxu0 %v858
      %1017 = vmatpush.msra.mxu0 %v854
      %1018 = vmatpush.msra.mxu0 %v850
      %1019 = vmatpush.msra.mxu0 %v846
      %1020 = vmatpush.msra.mxu0 %v842
      %1021 = vmatpush.msra.mxu0 %v788
      %1022 = vmatpush.msra.mxu0 %v784
      %1023 = vmatmul.f32.gmra.mxu0 %v835
      %v1024 = vpop.f32.mrf.mxu0
      %v1025 = vadd.f32 0.0, %v1024
      %1026 = vmatmul.f32.gmra.mxu0 %v837
      %v1027 = vpop.f32.mrf.mxu0
      %v1028 = vadd.f32 0.0, %v1027
      %1029 = vdwg.mxu0
      %1030 = vmatpush.msra.mxu0 0.0
      %1031 = vmatpush.msra.mxu0 0.0
      %1032 = vmatpush.msra.mxu0 0.0
      %1033 = vmatpush.msra.mxu0 0.0
      %1034 = vmatpush.msra.mxu0 0.0
      %1035 = vmatpush.msra.mxu0 0.0
      %1036 = vmatpush.msra.mxu0 0.0
      %1037 = vmatpush.msra.mxu0 0.0
      %1038 = vmatpush.msra.mxu0 0.0
      %1039 = vmatpush.msra.mxu0 0.0
      %1040 = vmatpush.msra.mxu0 0.0
      %1041 = vmatpush.msra.mxu0 0.0
      %1042 = vmatpush.msra.mxu0 0.0
      %1043 = vmatpush.msra.mxu0 0.0
      %1044 = vmatpush.msra.mxu0 %v902
      %1045 = vmatpush.msra.mxu0 %v898
      %1046 = vmatmul.f32.gmra.mxu0 %v956
      %v1047 = vpop.f32.mrf.mxu0
      %v1048 = vadd.f32 %v1025, %v1047
      %1049 = vmatmul.f32.gmra.mxu0 %v959
      %v1050 = vpop.f32.mrf.mxu0
      %v1051 = vadd.f32 %v1028, %v1050
      %1052 = vdwg.mxu0
      %v1053 = vld [vmem:[%s8] sm:$0x3]
      %v1055 = vperm.slane %v1053, 0
      %v1056 = vperm.slane %v1053, 1
      %v1059 = vmul.f32 %v1002, %v1055
      %v1060 = vmul.f32 %v1048, %v1056
      %v1061 = vmul.f32 %v1005, %v1055
      %v1062 = vmul.f32 %v1051, %v1056
      %1067 = vrot.lane.b32.xlu0 %v1059, 127
      %v1068 = vpop.permute.xlu0 %1067
      %1069 = vrot.lane.b32.xlu0 %v1060, 127
      %v1070 = vpop.permute.xlu0 %1069
      %1071 = vrot.lane.b32.xlu0 %v1061, 127
      %v1072 = vpop.permute.xlu0 %1071
      %1073 = vrot.lane.b32.xlu0 %v1062, 127
      %v1074 = vpop.permute.xlu0 %1073
      %v1075 = vsel %vm565, %v1068, %v1070
      %v1076 = vsel %vm565, %v1072, %v1074
      %1079 = vrot.lane.b32.xlu0 %v1059, 126
      %v1080 = vpop.permute.xlu0 %1079
      %1081 = vrot.lane.b32.xlu0 %v1060, 126
      %v1082 = vpop.permute.xlu0 %1081
      %1083 = vrot.lane.b32.xlu0 %v1061, 126
      %v1084 = vpop.permute.xlu0 %1083
      %1085 = vrot.lane.b32.xlu0 %v1062, 126
      %v1086 = vpop.permute.xlu0 %1085
      %v1087 = vsel %vm768, %v1080, %v1082
      %v1088 = vsel %vm768, %v1084, %v1086
      %1091 = vrot.lane.b32.xlu0 %v1059, 114
      %v1092 = vpop.permute.xlu0 %1091
      %1093 = vrot.lane.b32.xlu0 %v1060, 114
      %v1094 = vpop.permute.xlu0 %1093
      %1095 = vrot.lane.b32.xlu0 %v1061, 114
      %v1096 = vpop.permute.xlu0 %1095
      %1097 = vrot.lane.b32.xlu0 %v1062, 114
      %v1098 = vpop.permute.xlu0 %1097
      %v1099 = vsel %vm580, %v1092, %v1094
      %v1100 = vsel %vm580, %v1096, %v1098
      %1103 = vrot.lane.b32.xlu0 %v1059, 113
      %v1104 = vpop.permute.xlu0 %1103
      %1105 = vrot.lane.b32.xlu0 %v1060, 113
      %v1106 = vpop.permute.xlu0 %1105
      %1107 = vrot.lane.b32.xlu0 %v1061, 113
      %v1108 = vpop.permute.xlu0 %1107
      %1109 = vrot.lane.b32.xlu0 %v1062, 113
      %v1110 = vpop.permute.xlu0 %1109
      %v1111 = vsel %vm595, %v1104, %v1106
      %v1112 = vsel %vm595, %v1108, %v1110
      %1115 = vrot.lane.b32.xlu0 %v1059, 112
      %v1116 = vpop.permute.xlu0 %1115
      %1117 = vrot.lane.b32.xlu0 %v1060, 112
      %v1118 = vpop.permute.xlu0 %1117
      %1119 = vrot.lane.b32.xlu0 %v1061, 112
      %v1120 = vpop.permute.xlu0 %1119
      %1121 = vrot.lane.b32.xlu0 %v1062, 112
      %v1122 = vpop.permute.xlu0 %1121
      %v1123 = vsel %vm799, %v1116, %v1118
      %v1124 = vsel %vm799, %v1120, %v1122
      %1127 = vrot.lane.b32.xlu0 %v1059, 100
      %v1128 = vpop.permute.xlu0 %1127
      %1129 = vrot.lane.b32.xlu0 %v1060, 100
      %v1130 = vpop.permute.xlu0 %1129
      %1131 = vrot.lane.b32.xlu0 %v1061, 100
      %v1132 = vpop.permute.xlu0 %1131
      %1133 = vrot.lane.b32.xlu0 %v1062, 100
      %v1134 = vpop.permute.xlu0 %1133
      %v1135 = vsel %vm810, %v1128, %v1130
      %v1136 = vsel %vm810, %v1132, %v1134
      %1139 = vrot.lane.b32.xlu0 %v1059, 99
      %v1140 = vpop.permute.xlu0 %1139
      %1141 = vrot.lane.b32.xlu0 %v1060, 99
      %v1142 = vpop.permute.xlu0 %1141
      %1143 = vrot.lane.b32.xlu0 %v1061, 99
      %v1144 = vpop.permute.xlu0 %1143
      %1145 = vrot.lane.b32.xlu0 %v1062, 99
      %v1146 = vpop.permute.xlu0 %1145
      %v1147 = vsel %vm821, %v1140, %v1142
      %v1148 = vsel %vm821, %v1144, %v1146
      %1151 = vrot.lane.b32.xlu0 %v1059, 98
      %v1152 = vpop.permute.xlu0 %1151
      %1153 = vrot.lane.b32.xlu0 %v1060, 98
      %v1154 = vpop.permute.xlu0 %1153
      %1155 = vrot.lane.b32.xlu0 %v1061, 98
      %v1156 = vpop.permute.xlu0 %1155
      %1157 = vrot.lane.b32.xlu0 %v1062, 98
      %v1158 = vpop.permute.xlu0 %1157
      %v1159 = vsel %vm832, %v1152, %v1154
      %v1160 = vsel %vm832, %v1156, %v1158
      %v1163 = vld [vmem:[%s7] sm:$0xff]
      %v1164 = vld [vmem:[%s7 + $0x8] sm:$0xff]
      %v1165 = vld [vmem:[%s7 + $0x10] sm:$0xff]
      %v1166 = vld [vmem:[%s7 + $0x18] sm:$0xff]
      %v1167 = vld [vmem:[%s9] sm:$0xff]
      %v1168 = vld [vmem:[%s9 + $0x8] sm:$0xff]
      %1170 = vset.pattern.permute.xlu0 0
      %1171 = vperm.xlu0 %1170, %v1167
      %v1172 = vpop.permute.xlu0 %1171
      %1175 = vset.pattern.permute.xlu0 0
      %1176 = vperm.xlu0 %1175, %v1168
      %v1177 = vpop.permute.xlu0 %1176
      %v1180 = vsel %vm706, %v1164, 0
      %v1183 = vsel %vm706, %v1166, 0
      %1185 = vmatpush.msra.mxu0 %v1148
      %1186 = vmatpush.msra.mxu0 %v1147
      %1187 = vmatpush.msra.mxu0 %v1136
      %1188 = vmatpush.msra.mxu0 %v1135
      %1189 = vmatpush.msra.mxu0 %v1124
      %1190 = vmatpush.msra.mxu0 %v1123
      %1191 = vmatpush.msra.mxu0 %v1112
      %1192 = vmatpush.msra.mxu0 %v1111
      %1193 = vmatpush.msra.mxu0 %v1100
      %1194 = vmatpush.msra.mxu0 %v1099
      %1195 = vmatpush.msra.mxu0 %v1088
      %1196 = vmatpush.msra.mxu0 %v1087
      %1197 = vmatpush.msra.mxu0 %v1076
      %1198 = vmatpush.msra.mxu0 %v1075
      %1199 = vmatpush.msra.mxu0 %v1061
      %1200 = vmatpush.msra.mxu0 %v1059
      %1201 = vmatmul.f32.gmra.mxu0 %v1163
      %v1202 = vpop.f32.mrf.mxu0
      %v1203 = vadd.f32 %v1172, %v1202
      %1204 = vmatmul.f32.gmra.mxu0 %v1165
      %v1205 = vpop.f32.mrf.mxu0
      %v1206 = vadd.f32 %v1177, %v1205
      %1207 = vdwg.mxu0
      %1208 = vmatpush.msra.mxu0 0.0
      %1209 = vmatpush.msra.mxu0 0.0
      %1210 = vmatpush.msra.mxu0 0.0
      %1211 = vmatpush.msra.mxu0 0.0
      %1212 = vmatpush.msra.mxu0 0.0
      %1213 = vmatpush.msra.mxu0 0.0
      %1214 = vmatpush.msra.mxu0 0.0
      %1215 = vmatpush.msra.mxu0 0.0
      %1216 = vmatpush.msra.mxu0 0.0
      %1217 = vmatpush.msra.mxu0 0.0
      %1218 = vmatpush.msra.mxu0 0.0
      %1219 = vmatpush.msra.mxu0 0.0
      %1220 = vmatpush.msra.mxu0 0.0
      %1221 = vmatpush.msra.mxu0 0.0
      %1222 = vmatpush.msra.mxu0 %v1160
      %1223 = vmatpush.msra.mxu0 %v1159
      %1224 = vmatmul.f32.gmra.mxu0 %v1180
      %v1225 = vpop.f32.mrf.mxu0
      %v1226 = vadd.f32 %v1203, %v1225
      %1227 = vmatmul.f32.gmra.mxu0 %v1183
      %v1228 = vpop.f32.mrf.mxu0
      %v1229 = vadd.f32 %v1206, %v1228
      %1230 = vdwg.mxu0
      %v1231 = vmax.f32 %v1226, 0.0
      %v1232 = vmax.f32 %v1229, 0.0
      %1235 = vrot.lane.b32.xlu0 %v1231, 45
      %v1236 = vpop.permute.xlu0 %1235
      %1237 = vrot.lane.b32.xlu0 %v1232, 45
      %v1238 = vpop.permute.xlu0 %1237
      %v1241 = vadd.f32 %v746, %v1236
      %v1242 = vadd.f32 %v747, %v1236
      %v1243 = vadd.f32 %v748, %v1238
      %v1244 = vadd.f32 %v749, %v1238
      %1253 = vrot.lane.b32.xlu0 %v671, 125
      %v1254 = vpop.permute.xlu0 %1253
      %1255 = vrot.lane.b32.xlu0 %v672, 125
      %v1256 = vpop.permute.xlu0 %1255
      %1257 = vrot.lane.b32.xlu0 %v673, 125
      %v1258 = vpop.permute.xlu0 %1257
      %1259 = vrot.lane.b32.xlu0 %v674, 125
      %v1260 = vpop.permute.xlu0 %1259
      %vm1261 = vcmask 1022976
      %v1262 = vsel %vm1261, %v1254, %v1256
      %v1263 = vsel %vm1261, %v1258, %v1260
      %1268 = vrot.lane.b32.xlu0 %v671, 124
      %v1269 = vpop.permute.xlu0 %1268
      %1270 = vrot.lane.b32.xlu0 %v672, 124
      %v1271 = vpop.permute.xlu0 %1270
      %1272 = vrot.lane.b32.xlu0 %v673, 124
      %v1273 = vpop.permute.xlu0 %1272
      %1274 = vrot.lane.b32.xlu0 %v674, 124
      %v1275 = vpop.permute.xlu0 %1274
      %vm1276 = vcmask 1014784
      %v1277 = vsel %vm1276, %v1269, %v1271
      %v1278 = vsel %vm1276, %v1273, %v1275
      %1283 = vrot.lane.b32.xlu0 %v671, 123
      %v1284 = vpop.permute.xlu0 %1283
      %1285 = vrot.lane.b32.xlu0 %v672, 123
      %v1286 = vpop.permute.xlu0 %1285
      %1287 = vrot.lane.b32.xlu0 %v673, 123
      %v1288 = vpop.permute.xlu0 %1287
      %1289 = vrot.lane.b32.xlu0 %v674, 123
      %v1290 = vpop.permute.xlu0 %1289
      %vm1291 = vcmask 1006592
      %v1292 = vsel %vm1291, %v1284, %v1286
      %v1293 = vsel %vm1291, %v1288, %v1290
      %1298 = vrot.lane.b32.xlu0 %v671, 122
      %v1299 = vpop.permute.xlu0 %1298
      %1300 = vrot.lane.b32.xlu0 %v672, 122
      %v1301 = vpop.permute.xlu0 %1300
      %1302 = vrot.lane.b32.xlu0 %v673, 122
      %v1303 = vpop.permute.xlu0 %1302
      %1304 = vrot.lane.b32.xlu0 %v674, 122
      %v1305 = vpop.permute.xlu0 %1304
      %vm1306 = vcmask 998400
      %v1307 = vsel %vm1306, %v1299, %v1301
      %v1308 = vsel %vm1306, %v1303, %v1305
      %v1313 = vld [vmem:[%s10] sm:$0xff]
      %v1314 = vld [vmem:[%s10 + $0x8] sm:$0xff]
      %v1316 = vsel %vm799, %v1313, 0
      %v1319 = vsel %vm799, %v1314, 0
      %1321 = vmatpush.msra.mxu0 0.0
      %1322 = vmatpush.msra.mxu0 0.0
      %1323 = vmatpush.msra.mxu0 %v1308
      %1324 = vmatpush.msra.mxu0 %v1307
      %1325 = vmatpush.msra.mxu0 %v1293
      %1326 = vmatpush.msra.mxu0 %v1292
      %1327 = vmatpush.msra.mxu0 %v1278
      %1328 = vmatpush.msra.mxu0 %v1277
      %1329 = vmatpush.msra.mxu0 %v1263
      %1330 = vmatpush.msra.mxu0 %v1262
      %1331 = vmatpush.msra.mxu0 %v770
      %1332 = vmatpush.msra.mxu0 %v769
      %1333 = vmatpush.msra.mxu0 %v759
      %1334 = vmatpush.msra.mxu0 %v758
      %1335 = vmatpush.msra.mxu0 %v673
      %1336 = vmatpush.msra.mxu0 %v671
      %1337 = vmatmul.f32.gmra.mxu0 %v1316
      %v1338 = vpop.f32.mrf.mxu0
      %v1339 = vadd.f32 0.0, %v1338
      %1340 = vmatmul.f32.gmra.mxu0 %v1319
      %v1341 = vpop.f32.mrf.mxu0
      %v1342 = vadd.f32 0.0, %v1341
      %1343 = vdwg.mxu0
      %1344 = vmatpush.msra.mxu0 0.0
      %1345 = vmatpush.msra.mxu0 0.0
      %1346 = vmatpush.msra.mxu0 %v1305
      %1347 = vmatpush.msra.mxu0 %v1301
      %1348 = vmatpush.msra.mxu0 %v1290
      %1349 = vmatpush.msra.mxu0 %v1286
      %1350 = vmatpush.msra.mxu0 %v1275
      %1351 = vmatpush.msra.mxu0 %v1271
      %1352 = vmatpush.msra.mxu0 %v1260
      %1353 = vmatpush.msra.mxu0 %v1256
      %1354 = vmatpush.msra.mxu0 %v767
      %1355 = vmatpush.msra.mxu0 %v763
      %1356 = vmatpush.msra.mxu0 %v757
      %1357 = vmatpush.msra.mxu0 %v753
      %1358 = vmatpush.msra.mxu0 %v674
      %1359 = vmatpush.msra.mxu0 %v672
      %1360 = vmatmul.f32.gmra.mxu0 %v1316
      %v1361 = vpop.f32.mrf.mxu0
      %v1362 = vadd.f32 0.0, %v1361
      %1363 = vmatmul.f32.gmra.mxu0 %v1319
      %v1364 = vpop.f32.mrf.mxu0
      %v1365 = vadd.f32 0.0, %v1364
      %1366 = vdwg.mxu0
      %1371 = vrot.lane.b32.xlu0 %v1339, 114
      %v1372 = vpop.permute.xlu0 %1371
      %1373 = vrot.lane.b32.xlu0 %v1362, 114
      %v1374 = vpop.permute.xlu0 %1373
      %1375 = vrot.lane.b32.xlu0 %v1342, 114
      %v1376 = vpop.permute.xlu0 %1375
      %1377 = vrot.lane.b32.xlu0 %v1365, 114
      %v1378 = vpop.permute.xlu0 %1377
      %v1379 = vsel %vm580, %v1372, %v1374
      %v1380 = vsel %vm580, %v1376, %v1378
      %1383 = vrot.lane.b32.xlu0 %v1339, 100
      %v1384 = vpop.permute.xlu0 %1383
      %1385 = vrot.lane.b32.xlu0 %v1362, 100
      %v1386 = vpop.permute.xlu0 %1385
      %1387 = vrot.lane.b32.xlu0 %v1342, 100
      %v1388 = vpop.permute.xlu0 %1387
      %1389 = vrot.lane.b32.xlu0 %v1365, 100
      %v1390 = vpop.permute.xlu0 %1389
      %v1391 = vsel %vm810, %v1384, %v1386
      %v1392 = vsel %vm810, %v1388, %v1390
      %1395 = vrot.lane.b32.xlu0 %v1339, 86
      %v1396 = vpop.permute.xlu0 %1395
      %1397 = vrot.lane.b32.xlu0 %v1362, 86
      %v1398 = vpop.permute.xlu0 %1397
      %1399 = vrot.lane.b32.xlu0 %v1342, 86
      %v1400 = vpop.permute.xlu0 %1399
      %1401 = vrot.lane.b32.xlu0 %v1365, 86
      %v1402 = vpop.permute.xlu0 %1401
      %vm1403 = vcmask 703488
      %v1404 = vsel %vm1403, %v1396, %v1398
      %v1405 = vsel %vm1403, %v1400, %v1402
      %1408 = vrot.lane.b32.xlu0 %v1339, 72
      %v1409 = vpop.permute.xlu0 %1408
      %1410 = vrot.lane.b32.xlu0 %v1362, 72
      %v1411 = vpop.permute.xlu0 %1410
      %1412 = vrot.lane.b32.xlu0 %v1342, 72
      %v1413 = vpop.permute.xlu0 %1412
      %1414 = vrot.lane.b32.xlu0 %v1365, 72
      %v1415 = vpop.permute.xlu0 %1414
      %vm1416 = vcmask 588800
      %v1417 = vsel %vm1416, %v1409, %v1411
      %v1418 = vsel %vm1416, %v1413, %v1415
      %1421 = vrot.lane.b32.xlu0 %v1339, 58
      %v1422 = vpop.permute.xlu0 %1421
      %1423 = vrot.lane.b32.xlu0 %v1362, 58
      %v1424 = vpop.permute.xlu0 %1423
      %1425 = vrot.lane.b32.xlu0 %v1342, 58
      %v1426 = vpop.permute.xlu0 %1425
      %1427 = vrot.lane.b32.xlu0 %v1365, 58
      %v1428 = vpop.permute.xlu0 %1427
      %vm1429 = vcmask 474112
      %v1430 = vsel %vm1429, %v1422, %v1424
      %v1431 = vsel %vm1429, %v1426, %v1428
      %1434 = vrot.lane.b32.xlu0 %v1339, 44
      %v1435 = vpop.permute.xlu0 %1434
      %1436 = vrot.lane.b32.xlu0 %v1362, 44
      %v1437 = vpop.permute.xlu0 %1436
      %1438 = vrot.lane.b32.xlu0 %v1342, 44
      %v1439 = vpop.permute.xlu0 %1438
      %1440 = vrot.lane.b32.xlu0 %v1365, 44
      %v1441 = vpop.permute.xlu0 %1440
      %vm1442 = vcmask 359424
      %v1443 = vsel %vm1442, %v1435, %v1437
      %v1444 = vsel %vm1442, %v1439, %v1441
      %v1447 = vld [vmem:[%s11] sm:$0xff]
      %v1448 = vld [vmem:[%s11 + $0x8] sm:$0xff]
      %v1449 = vld [vmem:[%s12] sm:$0xff]
      %v1450 = vld [vmem:[%s12 + $0x8] sm:$0xff]
      %1452 = vset.pattern.permute.xlu0 0
      %1453 = vperm.xlu0 %1452, %v1449
      %v1454 = vpop.permute.xlu0 %1453
      %1457 = vset.pattern.permute.xlu0 0
      %1458 = vperm.xlu0 %1457, %v1450
      %v1459 = vpop.permute.xlu0 %1458
      %v1462 = vsel %vm799, %v1447, 0
      %v1465 = vsel %vm799, %v1448, 0
      %1467 = vmatpush.msra.mxu0 0.0
      %1468 = vmatpush.msra.mxu0 0.0
      %1469 = vmatpush.msra.mxu0 %v1444
      %1470 = vmatpush.msra.mxu0 %v1443
      %1471 = vmatpush.msra.mxu0 %v1431
      %1472 = vmatpush.msra.mxu0 %v1430
      %1473 = vmatpush.msra.mxu0 %v1418
      %1474 = vmatpush.msra.mxu0 %v1417
      %1475 = vmatpush.msra.mxu0 %v1405
      %1476 = vmatpush.msra.mxu0 %v1404
      %1477 = vmatpush.msra.mxu0 %v1392
      %1478 = vmatpush.msra.mxu0 %v1391
      %1479 = vmatpush.msra.mxu0 %v1380
      %1480 = vmatpush.msra.mxu0 %v1379
      %1481 = vmatpush.msra.mxu0 %v1342
      %1482 = vmatpush.msra.mxu0 %v1339
      %1483 = vmatmul.f32.gmra.mxu0 %v1462
      %v1484 = vpop.f32.mrf.mxu0
      %v1485 = vadd.f32 %v1454, %v1484
      %1486 = vmatmul.f32.gmra.mxu0 %v1465
      %v1487 = vpop.f32.mrf.mxu0
      %v1488 = vadd.f32 %v1459, %v1487
      %1489 = vdwg.mxu0
      %v1490 = vmax.f32 %v1485, 0.0
      %v1491 = vmax.f32 %v1488, 0.0
      %1494 = vrot.lane.b32.xlu0 %v1490, 45
      %v1495 = vpop.permute.xlu0 %1494
      %1496 = vrot.lane.b32.xlu0 %v1491, 45
      %v1497 = vpop.permute.xlu0 %1496
      %v1500 = vadd.f32 %v1241, %v1495
      %v1501 = vadd.f32 %v1242, %v1495
      %v1502 = vadd.f32 %v1243, %v1497
      %v1503 = vadd.f32 %v1244, %v1497
      %v1504 = vld [vmem:[%s13] sm:$0xff]
      %v1505 = vld [vmem:[%s13 + $0x8] sm:$0xff]
      %1507 = vset.pattern.permute.xlu0 0
      %1508 = vperm.xlu0 %1507, %v1504
      %v1509 = vpop.permute.xlu0 %1508
      %1512 = vset.pattern.permute.xlu0 0
      %1513 = vperm.xlu0 %1512, %v1505
      %v1514 = vpop.permute.xlu0 %1513
      %v1516 = vmul.f32 %v1509, %v671
      %v1517 = vmul.f32 %v1509, %v672
      %v1518 = vmul.f32 %v1514, %v673
      %v1519 = vmul.f32 %v1514, %v674
      %s1520 = scalar_lea.vmem %s13, 16
      %v1521 = vld [vmem:[%s1520] sm:$0xff]
      %v1522 = vld [vmem:[%s1520 + $0x8] sm:$0xff]
      %1524 = vset.pattern.permute.xlu0 0
      %1525 = vperm.xlu0 %1524, %v1521
      %v1526 = vpop.permute.xlu0 %1525
      %1529 = vset.pattern.permute.xlu0 0
      %1530 = vperm.xlu0 %1529, %v1522
      %v1531 = vpop.permute.xlu0 %1530
      %v1533 = vmul.f32 %v1526, %v671
      %v1534 = vmul.f32 %v1526, %v672
      %v1535 = vmul.f32 %v1531, %v673
      %v1536 = vmul.f32 %v1531, %v674
      %1541 = vrot.lane.b32.xlu0 %v1533, 127
      %v1542 = vpop.permute.xlu0 %1541
      %1543 = vrot.lane.b32.xlu0 %v1534, 127
      %v1544 = vpop.permute.xlu0 %1543
      %1545 = vrot.lane.b32.xlu0 %v1535, 127
      %v1546 = vpop.permute.xlu0 %1545
      %1547 = vrot.lane.b32.xlu0 %v1536, 127
      %v1548 = vpop.permute.xlu0 %1547
      %v1549 = vsel %vm565, %v1542, %v1544
      %v1550 = vsel %vm565, %v1546, %v1548
      %v1555 = vadd.f32 %v1516, %v1549
      %v1556 = vadd.f32 %v1517, %v1544
      %v1557 = vadd.f32 %v1518, %v1550
      %v1558 = vadd.f32 %v1519, %v1548
      %s1559 = scalar_lea.vmem %s13, 32
      %v1560 = vld [vmem:[%s1559] sm:$0xff]
      %v1561 = vld [vmem:[%s1559 + $0x8] sm:$0xff]
      %1563 = vset.pattern.permute.xlu0 0
      %1564 = vperm.xlu0 %1563, %v1560
      %v1565 = vpop.permute.xlu0 %1564
      %1568 = vset.pattern.permute.xlu0 0
      %1569 = vperm.xlu0 %1568, %v1561
      %v1570 = vpop.permute.xlu0 %1569
      %v1572 = vmul.f32 %v1565, %v671
      %v1573 = vmul.f32 %v1565, %v672
      %v1574 = vmul.f32 %v1570, %v673
      %v1575 = vmul.f32 %v1570, %v674
      %1580 = vrot.lane.b32.xlu0 %v1572, 126
      %v1581 = vpop.permute.xlu0 %1580
      %1582 = vrot.lane.b32.xlu0 %v1573, 126
      %v1583 = vpop.permute.xlu0 %1582
      %1584 = vrot.lane.b32.xlu0 %v1574, 126
      %v1585 = vpop.permute.xlu0 %1584
      %1586 = vrot.lane.b32.xlu0 %v1575, 126
      %v1587 = vpop.permute.xlu0 %1586
      %v1588 = vsel %vm768, %v1581, %v1583
      %v1589 = vsel %vm768, %v1585, %v1587
      %v1594 = vadd.f32 %v1555, %v1588
      %v1595 = vadd.f32 %v1556, %v1583
      %v1596 = vadd.f32 %v1557, %v1589
      %v1597 = vadd.f32 %v1558, %v1587
      %s1598 = scalar_lea.vmem %s13, 48
      %v1599 = vld [vmem:[%s1598] sm:$0xff]
      %v1600 = vld [vmem:[%s1598 + $0x8] sm:$0xff]
      %1602 = vset.pattern.permute.xlu0 0
      %1603 = vperm.xlu0 %1602, %v1599
      %v1604 = vpop.permute.xlu0 %1603
      %1607 = vset.pattern.permute.xlu0 0
      %1608 = vperm.xlu0 %1607, %v1600
      %v1609 = vpop.permute.xlu0 %1608
      %v1611 = vmul.f32 %v1604, %v671
      %v1612 = vmul.f32 %v1604, %v672
      %v1613 = vmul.f32 %v1609, %v673
      %v1614 = vmul.f32 %v1609, %v674
      %1619 = vrot.lane.b32.xlu0 %v1611, 114
      %v1620 = vpop.permute.xlu0 %1619
      %1621 = vrot.lane.b32.xlu0 %v1612, 114
      %v1622 = vpop.permute.xlu0 %1621
      %1623 = vrot.lane.b32.xlu0 %v1613, 114
      %v1624 = vpop.permute.xlu0 %1623
      %1625 = vrot.lane.b32.xlu0 %v1614, 114
      %v1626 = vpop.permute.xlu0 %1625
      %v1627 = vsel %vm580, %v1620, %v1622
      %v1628 = vsel %vm580, %v1624, %v1626
      %v1633 = vadd.f32 %v1594, %v1627
      %v1634 = vadd.f32 %v1595, %v1622
      %v1635 = vadd.f32 %v1596, %v1628
      %v1636 = vadd.f32 %v1597, %v1626
      %s1637 = scalar_lea.vmem %s13, 64
      %v1638 = vld [vmem:[%s1637] sm:$0xff]
      %v1639 = vld [vmem:[%s1637 + $0x8] sm:$0xff]
      %1641 = vset.pattern.permute.xlu0 0
      %1642 = vperm.xlu0 %1641, %v1638
      %v1643 = vpop.permute.xlu0 %1642
      %1646 = vset.pattern.permute.xlu0 0
      %1647 = vperm.xlu0 %1646, %v1639
      %v1648 = vpop.permute.xlu0 %1647
      %v1650 = vmul.f32 %v1643, %v671
      %v1651 = vmul.f32 %v1643, %v672
      %v1652 = vmul.f32 %v1648, %v673
      %v1653 = vmul.f32 %v1648, %v674
      %1658 = vrot.lane.b32.xlu0 %v1650, 113
      %v1659 = vpop.permute.xlu0 %1658
      %1660 = vrot.lane.b32.xlu0 %v1651, 113
      %v1661 = vpop.permute.xlu0 %1660
      %1662 = vrot.lane.b32.xlu0 %v1652, 113
      %v1663 = vpop.permute.xlu0 %1662
      %1664 = vrot.lane.b32.xlu0 %v1653, 113
      %v1665 = vpop.permute.xlu0 %1664
      %v1666 = vsel %vm595, %v1659, %v1661
      %v1667 = vsel %vm595, %v1663, %v1665
      %v1672 = vadd.f32 %v1633, %v1666
      %v1673 = vadd.f32 %v1634, %v1661
      %v1674 = vadd.f32 %v1635, %v1667
      %v1675 = vadd.f32 %v1636, %v1665
      %s1676 = scalar_lea.vmem %s13, 80
      %v1677 = vld [vmem:[%s1676] sm:$0xff]
      %v1678 = vld [vmem:[%s1676 + $0x8] sm:$0xff]
      %1680 = vset.pattern.permute.xlu0 0
      %1681 = vperm.xlu0 %1680, %v1677
      %v1682 = vpop.permute.xlu0 %1681
      %1685 = vset.pattern.permute.xlu0 0
      %1686 = vperm.xlu0 %1685, %v1678
      %v1687 = vpop.permute.xlu0 %1686
      %v1689 = vmul.f32 %v1682, %v671
      %v1690 = vmul.f32 %v1682, %v672
      %v1691 = vmul.f32 %v1687, %v673
      %v1692 = vmul.f32 %v1687, %v674
      %1697 = vrot.lane.b32.xlu0 %v1689, 112
      %v1698 = vpop.permute.xlu0 %1697
      %1699 = vrot.lane.b32.xlu0 %v1690, 112
      %v1700 = vpop.permute.xlu0 %1699
      %1701 = vrot.lane.b32.xlu0 %v1691, 112
      %v1702 = vpop.permute.xlu0 %1701
      %1703 = vrot.lane.b32.xlu0 %v1692, 112
      %v1704 = vpop.permute.xlu0 %1703
      %v1705 = vsel %vm799, %v1698, %v1700
      %v1706 = vsel %vm799, %v1702, %v1704
      %v1711 = vadd.f32 %v1672, %v1705
      %v1712 = vadd.f32 %v1673, %v1700
      %v1713 = vadd.f32 %v1674, %v1706
      %v1714 = vadd.f32 %v1675, %v1704
      %s1715 = scalar_lea.vmem %s13, 96
      %v1716 = vld [vmem:[%s1715] sm:$0xff]
      %v1717 = vld [vmem:[%s1715 + $0x8] sm:$0xff]
      %1719 = vset.pattern.permute.xlu0 0
      %1720 = vperm.xlu0 %1719, %v1716
      %v1721 = vpop.permute.xlu0 %1720
      %1724 = vset.pattern.permute.xlu0 0
      %1725 = vperm.xlu0 %1724, %v1717
      %v1726 = vpop.permute.xlu0 %1725
      %v1728 = vmul.f32 %v1721, %v671
      %v1729 = vmul.f32 %v1721, %v672
      %v1730 = vmul.f32 %v1726, %v673
      %v1731 = vmul.f32 %v1726, %v674
      %1736 = vrot.lane.b32.xlu0 %v1728, 100
      %v1737 = vpop.permute.xlu0 %1736
      %1738 = vrot.lane.b32.xlu0 %v1729, 100
      %v1739 = vpop.permute.xlu0 %1738
      %1740 = vrot.lane.b32.xlu0 %v1730, 100
      %v1741 = vpop.permute.xlu0 %1740
      %1742 = vrot.lane.b32.xlu0 %v1731, 100
      %v1743 = vpop.permute.xlu0 %1742
      %v1744 = vsel %vm810, %v1737, %v1739
      %v1745 = vsel %vm810, %v1741, %v1743
      %v1750 = vadd.f32 %v1711, %v1744
      %v1751 = vadd.f32 %v1712, %v1739
      %v1752 = vadd.f32 %v1713, %v1745
      %v1753 = vadd.f32 %v1714, %v1743
      %s1754 = scalar_lea.vmem %s13, 112
      %v1755 = vld [vmem:[%s1754] sm:$0xff]
      %v1756 = vld [vmem:[%s1754 + $0x8] sm:$0xff]
      %1758 = vset.pattern.permute.xlu0 0
      %1759 = vperm.xlu0 %1758, %v1755
      %v1760 = vpop.permute.xlu0 %1759
      %1763 = vset.pattern.permute.xlu0 0
      %1764 = vperm.xlu0 %1763, %v1756
      %v1765 = vpop.permute.xlu0 %1764
      %v1767 = vmul.f32 %v1760, %v671
      %v1768 = vmul.f32 %v1760, %v672
      %v1769 = vmul.f32 %v1765, %v673
      %v1770 = vmul.f32 %v1765, %v674
      %1775 = vrot.lane.b32.xlu0 %v1767, 99
      %v1776 = vpop.permute.xlu0 %1775
      %1777 = vrot.lane.b32.xlu0 %v1768, 99
      %v1778 = vpop.permute.xlu0 %1777
      %1779 = vrot.lane.b32.xlu0 %v1769, 99
      %v1780 = vpop.permute.xlu0 %1779
      %1781 = vrot.lane.b32.xlu0 %v1770, 99
      %v1782 = vpop.permute.xlu0 %1781
      %v1783 = vsel %vm821, %v1776, %v1778
      %v1784 = vsel %vm821, %v1780, %v1782
      %v1789 = vadd.f32 %v1750, %v1783
      %v1790 = vadd.f32 %v1751, %v1778
      %v1791 = vadd.f32 %v1752, %v1784
      %v1792 = vadd.f32 %v1753, %v1782
      %s1793 = scalar_lea.vmem %s13, 128
      %v1794 = vld [vmem:[%s1793] sm:$0xff]
      %v1795 = vld [vmem:[%s1793 + $0x8] sm:$0xff]
      %1797 = vset.pattern.permute.xlu0 0
      %1798 = vperm.xlu0 %1797, %v1794
      %v1799 = vpop.permute.xlu0 %1798
      %1802 = vset.pattern.permute.xlu0 0
      %1803 = vperm.xlu0 %1802, %v1795
      %v1804 = vpop.permute.xlu0 %1803
      %v1806 = vmul.f32 %v1799, %v671
      %v1807 = vmul.f32 %v1799, %v672
      %v1808 = vmul.f32 %v1804, %v673
      %v1809 = vmul.f32 %v1804, %v674
      %1814 = vrot.lane.b32.xlu0 %v1806, 98
      %v1815 = vpop.permute.xlu0 %1814
      %1816 = vrot.lane.b32.xlu0 %v1807, 98
      %v1817 = vpop.permute.xlu0 %1816
      %1818 = vrot.lane.b32.xlu0 %v1808, 98
      %v1819 = vpop.permute.xlu0 %1818
      %1820 = vrot.lane.b32.xlu0 %v1809, 98
      %v1821 = vpop.permute.xlu0 %1820
      %v1822 = vsel %vm832, %v1815, %v1817
      %v1823 = vsel %vm832, %v1819, %v1821
      %v1828 = vadd.f32 %v1789, %v1822
      %v1829 = vadd.f32 %v1790, %v1817
      %v1830 = vadd.f32 %v1791, %v1823
      %v1831 = vadd.f32 %v1792, %v1821
      %v1832 = vld [vmem:[%s14] sm:$0xff]
      %v1833 = vld [vmem:[%s14 + $0x8] sm:$0xff]
      %1835 = vset.pattern.permute.xlu0 0
      %1836 = vperm.xlu0 %1835, %v1832
      %v1837 = vpop.permute.xlu0 %1836
      %1840 = vset.pattern.permute.xlu0 0
      %1841 = vperm.xlu0 %1840, %v1833
      %v1842 = vpop.permute.xlu0 %1841
      %v1844 = vadd.f32 %v1828, %v1837
      %v1845 = vadd.f32 %v1829, %v1837
      %v1846 = vadd.f32 %v1830, %v1842
      %v1847 = vadd.f32 %v1831, %v1842
      %v1848 = vld [vmem:[%s15] sm:$0xff]
      %v1849 = vld [vmem:[%s15 + $0x8] sm:$0xff]
      %v1850 = vld [vmem:[%s16] sm:$0xff]
      %v1851 = vld [vmem:[%s16 + $0x8] sm:$0xff]
      %1853 = vset.pattern.permute.xlu0 0
      %1854 = vperm.xlu0 %1853, %v1850
      %v1855 = vpop.permute.xlu0 %1854
      %1858 = vset.pattern.permute.xlu0 0
      %1859 = vperm.xlu0 %1858, %v1851
      %v1860 = vpop.permute.xlu0 %1859
      %1866 = vrot.lane.b32.xlu0 %v1844, 98
      %v1867 = vpop.permute.xlu0 %1866
      %1868 = vrot.lane.b32.xlu0 %v1845, 98
      %v1869 = vpop.permute.xlu0 %1868
      %1870 = vrot.lane.b32.xlu0 %v1846, 98
      %v1871 = vpop.permute.xlu0 %1870
      %1872 = vrot.lane.b32.xlu0 %v1847, 98
      %v1873 = vpop.permute.xlu0 %1872
      %v1874 = vsel %vm832, %v1867, %v1869
      %v1875 = vsel %vm832, %v1871, %v1873
      %v1879 = vsel %vm706, %v1848, 0
      %v1882 = vsel %vm706, %v1849, 0
      %1884 = vmatpush.msra.mxu0 0.0
      %1885 = vmatpush.msra.mxu0 0.0
      %1886 = vmatpush.msra.mxu0 0.0
      %1887 = vmatpush.msra.mxu0 0.0
      %1888 = vmatpush.msra.mxu0 0.0
      %1889 = vmatpush.msra.mxu0 0.0
      %1890 = vmatpush.msra.mxu0 0.0
      %1891 = vmatpush.msra.mxu0 0.0
      %1892 = vmatpush.msra.mxu0 0.0
      %1893 = vmatpush.msra.mxu0 0.0
      %1894 = vmatpush.msra.mxu0 0.0
      %1895 = vmatpush.msra.mxu0 0.0
      %1896 = vmatpush.msra.mxu0 0.0
      %1897 = vmatpush.msra.mxu0 0.0
      %1898 = vmatpush.msra.mxu0 %v1875
      %1899 = vmatpush.msra.mxu0 %v1874
      %1900 = vmatmul.f32.gmra.mxu0 %v1879
      %v1901 = vpop.f32.mrf.mxu0
      %v1902 = vadd.f32 %v1855, %v1901
      %1903 = vmatmul.f32.gmra.mxu0 %v1882
      %v1904 = vpop.f32.mrf.mxu0
      %v1905 = vadd.f32 %v1860, %v1904
      %1906 = vdwg.mxu0
      %v1907 = vmax.f32 %v1902, 0.0
      %v1908 = vmax.f32 %v1905, 0.0
      %1911 = vrot.lane.b32.xlu0 %v1907, 45
      %v1912 = vpop.permute.xlu0 %1911
      %1913 = vrot.lane.b32.xlu0 %v1908, 45
      %v1914 = vpop.permute.xlu0 %1913
      %v1917 = vadd.f32 %v1500, %v1912
      %v1918 = vadd.f32 %v1501, %v1912
      %v1919 = vadd.f32 %v1502, %v1914
      %v1920 = vadd.f32 %v1503, %v1914
      %1925 = vrot.lane.b32.xlu0 %v1917, 83
      %v1926 = vpop.permute.xlu0 %1925
      %1927 = vrot.lane.b32.xlu0 %v1918, 83
      %v1928 = vpop.permute.xlu0 %1927
      %1929 = vrot.lane.b32.xlu0 %v1919, 83
      %v1930 = vpop.permute.xlu0 %1929
      %1931 = vrot.lane.b32.xlu0 %v1920, 83
      %v1932 = vpop.permute.xlu0 %1931
      %v1933 = vsel %vm701, %v1926, %v1928
      %v1934 = vsel %vm701, %v1930, %v1932
      %1937 = vst [vmem:[%s548] sm:$0xff] %v1933
      %1938 = vst [vmem:[%s548 + $0x8] sm:$0xff] %v1934
      %p1939 = scmp.lt.s32.totalorder %s28, 1
      %s1940 = scalar_select %p1939, %s28, 1
      %s1941 = smul.addr %s1940, 2
      %s1942 = smul.addr %s1941, 8
      %s1943 = scalar_lea.vmem %s17, %s1942
      // Predicated region
      $region89: #{up_forward.1} parent=87 // pred_check
        %p1944 = pneg %p408
      $region90: #{up_forward.1} parent=87 // pred_check_branch
        %1946 = sbr.rel (%p1944) target = $region92
      $region91: #{up_forward.1} parent=87 // pred_region
        _
      $region92: #{up_forward.1} parent=87 // pred_fallthru
        _
    $region88: #{up_forward.1} parent=5 // pred_fallthru
      _
    %p1947 = scmp.le.s32.totalorder 2, %s23
    // Predicated region
    $region93: #{up_forward.1} parent=5 // pred_check
      %p1948 = pneg %p1947
    $region94: #{up_forward.1} parent=5 // pred_check_branch
      %1950 = sbr.rel (%p1948) target = $region96
    $region95: #{up_forward.1} parent=5 // pred_region
      %s1951 = ssub.s32 %s23, 2
      // Predicated region
      $region97: #{up_forward.1} parent=95 // pred_check
        %p1952 = pneg %p414
      $region98: #{up_forward.1} parent=95 // pred_check_branch
        %1954 = sbr.rel (%p1952) target = $region100
      $region99: #{up_forward.1} parent=95 // pred_region
        %p1955 = scmp.lt.s32.totalorder %s29, 1
        %s1956 = scalar_select %p1955, %s29, 1
        %s1957 = smul.addr %s1956, 2
        %s1958 = smul.addr %s1957, 8
        %s1959 = scalar_lea.vmem %s17, %s1958
      $region100: #{up_forward.1} parent=95 // pred_fallthru
        _
    $region96: #{up_forward.1} parent=5 // pred_fallthru
      _
  $region6: #{up_forward.1} parent=0 // loop_footer
    %s27 = sadd.s32 1, %s23
  $region7: #{up_forward.1} parent=0 // loop_footer_branch
    %22 = sbr.rel target = $region3
  $region8: #{up_forward.1} parent=0 // loop_exit
    _

</llo_original>
